<compile_context>
chip_gen: v7x
topology: tpu7x:2x2x1
jax: 0.10.0
libtpu: 0.0.40
codegen_flags: <defaults>
</compile_context>

<pallas_src>
import jax
import jax.numpy as jnp
from jax.experimental import pallas as pl
from jax.experimental.pallas import tpu as pltpu


def _round_up(x, m):
    return ((x + m - 1) // m) * m


def _vmem_limit(nbytes):
    # Explicit scoped-VMEM request: 2x the static estimate + 8 MiB compiler
    # headroom, floored at 32 MiB (>= every generation's default) and capped
    # below v7x's 64 MiB physical per-core VMEM.
    return int(min(max(2 * nbytes + (8 << 20), 32 << 20), 56 << 20))


# --------------------------------------------------------------------------
# Kernel 1: embedding gather (DMA) + fused single GRU step.
# --------------------------------------------------------------------------
def _gru_step_kernel(ids_ref, h_ref, wih_ref, whh_ref, bih_ref, bhh_ref,
                     emb_hbm, hnew_ref, hbf16_ref, x_scr, sem):
    """ids (SMEM) -> gather emb rows from HBM -> GRU step (gate order r,z,n)."""
    Bp = x_scr.shape[0]
    Hp = h_ref.shape[1]

    # Gather the Bp embedding rows straight from HBM.  Padded batch rows carry
    # token id 0, which is the all-zero padding row, so they read zeros.
    copies = []
    for b in range(Bp):
        cp = pltpu.make_async_copy(emb_hbm.at[pl.ds(ids_ref[b], 1)],
                                   x_scr.at[pl.ds(b, 1)],
                                   sem.at[b])
        cp.start()
        copies.append(cp)
    for cp in copies:
        cp.wait()

    x_b = x_scr[...].astype(jnp.bfloat16)        # (Bp, Ep) bf16 MXU operand
    h = h_ref[...]                               # (Bp, Hp) f32 previous hidden
    h_b = h.astype(jnp.bfloat16)

    # Two fused gate matmuls (instead of six); f32 accumulation + f32 biases.
    gi = jnp.dot(x_b, wih_ref[...], preferred_element_type=jnp.float32) + bih_ref[...]
    gh = jnp.dot(h_b, whh_ref[...], preferred_element_type=jnp.float32) + bhh_ref[...]

    # Sequential gate evaluation on lane-aligned Hp-wide slices (Hp % 128 == 0).
    r = jax.nn.sigmoid(gi[:, 0 * Hp:1 * Hp] + gh[:, 0 * Hp:1 * Hp])
    z = jax.nn.sigmoid(gi[:, 1 * Hp:2 * Hp] + gh[:, 1 * Hp:2 * Hp])
    n = jnp.tanh(gi[:, 2 * Hp:3 * Hp] + r * gh[:, 2 * Hp:3 * Hp])
    h_new = (1.0 - z) * n + z * h                # (Bp, Hp) f32

    hnew_ref[...] = h_new
    hbf16_ref[...] = h_new.astype(jnp.bfloat16)


# --------------------------------------------------------------------------
# Kernel 2: vocab-tiled FC head (independent tiles -> "parallel" on v7x).
# --------------------------------------------------------------------------
def _fc_kernel(h_ref, wfc_ref, bfc_ref, pred_ref):
    pred_ref[...] = (
        jnp.dot(h_ref[...], wfc_ref[...], preferred_element_type=jnp.float32)
        + bfc_ref[...])


def gru_decoder_step(ids_p, h_p, w_ih_p, w_hh_p, b_ih_p, b_hh_p, emb_p,
                     w_fc_p, b_fc_p, tile_v):
    """One fused GRU step + vocab-tiled FC head on padded operands."""
    Bp, Hp = h_p.shape
    Ep = emb_p.shape[1]
    Vp = w_fc_p.shape[1]
    num_tiles = Vp // tile_v

    # ---- GRU step (single invocation, single-buffered operands) ----
    gru_bytes = (Ep * 3 * Hp * 2 + Hp * 3 * Hp * 2      # W_ih, W_hh (bf16)
                 + 2 * 3 * Hp * 4                       # biases (f32)
                 + Bp * Hp * 4 + Bp * Ep * 4            # h, x scratch (f32)
                 + Bp * Hp * (4 + 2)                    # outputs
                 + 2 * Bp * 3 * Hp * 4)                 # gi / gh temporaries
    h_new, h_bf16 = pl.pallas_call(
        _gru_step_kernel,
        out_shape=(jax.ShapeDtypeStruct((Bp, Hp), jnp.float32),
                   jax.ShapeDtypeStruct((Bp, Hp), jnp.bfloat16)),
        in_specs=[
            pl.BlockSpec(memory_space=pltpu.MemorySpace.SMEM),   # token ids
            pl.BlockSpec(memory_space=pltpu.MemorySpace.VMEM),   # h prev (f32)
            pl.BlockSpec(memory_space=pltpu.MemorySpace.VMEM),   # W_ih (Ep,3Hp) bf16
            pl.BlockSpec(memory_space=pltpu.MemorySpace.VMEM),   # W_hh (Hp,3Hp) bf16
            pl.BlockSpec(memory_space=pltpu.MemorySpace.VMEM),   # b_ih (1,3Hp) f32
            pl.BlockSpec(memory_space=pltpu.MemorySpace.VMEM),   # b_hh (1,3Hp) f32
            pl.BlockSpec(memory_space=pl.ANY),                   # emb table (HBM)
        ],
        out_specs=(pl.BlockSpec(memory_space=pltpu.MemorySpace.VMEM),
                   pl.BlockSpec(memory_space=pltpu.MemorySpace.VMEM)),
        scratch_shapes=[pltpu.VMEM((Bp, Ep), jnp.float32),
                        pltpu.SemaphoreType.DMA((Bp,))],
        compiler_params=pltpu.CompilerParams(
            vmem_limit_bytes=_vmem_limit(gru_bytes)),
    )(ids_p, h_p, w_ih_p, w_hh_p, b_ih_p, b_hh_p, emb_p)

    # ---- FC head: stream W_fc tiles; every tile independent -> "parallel"
    #      so v7x's two TensorCores split the dominant HBM stream. ----
    fc_bytes = (2 * Hp * tile_v * 2                      # W_fc tiles (double buffered)
                + 2 * tile_v * 4                         # b_fc tiles
                + 2 * Bp * Hp * 2                        # h operand
                + 2 * Bp * tile_v * 4)                   # pred tiles
    pred = pl.pallas_call(
        _fc_kernel,
        out_shape=jax.ShapeDtypeStruct((Bp, Vp), jnp.float32),
        grid=(num_tiles,),
        in_specs=[
            pl.BlockSpec((Bp, Hp), lambda j: (0, 0)),       # h_new (bf16)
            pl.BlockSpec((Hp, tile_v), lambda j: (0, j)),   # W_fc tile (bf16)
            pl.BlockSpec((1, tile_v), lambda j: (0, j)),    # b_fc tile (f32)
        ],
        out_specs=pl.BlockSpec((Bp, tile_v), lambda j: (0, j)),
        compiler_params=pltpu.CompilerParams(
            dimension_semantics=("parallel",),
            vmem_limit_bytes=_vmem_limit(fc_bytes)),
    )(h_bf16, w_fc_p, b_fc_p)

    return pred, h_new


class Decoder:
    """JAX/Pallas port of the PyTorch Decoder (embedding + GRU + Linear)."""

    # Max vocab-tile width.  Explicit vmem_limit_bytes keeps this safe on all
    # generations (v5e 16 MiB default scoped limit no longer applies).
    TILE_V_MAX = 4096

    def __init__(self, vocab_size, emb_size, hidden_size, key):
        self.V, self.E, self.H = vocab_size, emb_size, hidden_size
        self.Ep = _round_up(emb_size, 128)
        self.Hp = _round_up(hidden_size, 128)

        # Vocab padding: pad to a multiple of 128, then split evenly into
        # <= TILE_V_MAX-wide tiles (minimizes padded columns streamed per step).
        vp128 = _round_up(vocab_size, 128)
        num_tiles = max(1, -(-vp128 // self.TILE_V_MAX))
        self.tile_v = _round_up(-(-vp128 // num_tiles), 128)
        self.Vp = self.tile_v * num_tiles

        ks = jax.random.split(key, 7)
        scale = 0.1
        H, E, V = hidden_size, emb_size, vocab_size

        # Embedding (padding_idx=0 -> zero row).  Kept f32 so the per-row
        # HBM->VMEM gather DMAs are 32-bit sublane granular; cast to bf16
        # in-kernel for the MXU.
        emb = scale * jax.random.normal(ks[0], (V, E), jnp.float32)
        emb = emb.at[0].set(0.0)
        self.emb_p = jnp.zeros((V, self.Ep), jnp.float32).at[:, :E].set(emb)

        # GRU params, PyTorch layout: weight_ih (3H, E), weight_hh (3H, H),
        # biases (3H,); gate order r, z, n.
        w_ih = scale * jax.random.normal(ks[1], (3 * H, E), jnp.float32)
        w_hh = scale * jax.random.normal(ks[2], (3 * H, H), jnp.float32)
        b_ih = scale * jax.random.normal(ks[3], (3 * H,), jnp.float32)
        b_hh = scale * jax.random.normal(ks[4], (3 * H,), jnp.float32)

        # Pack gates side-by-side: (in, 3*Hp), gate g in lane-aligned columns
        # [g*Hp, g*Hp + H); padding columns are zero.
        def pack_gates(w, in_dim, in_pad):
            out = jnp.zeros((in_pad, 3 * self.Hp), jnp.bfloat16)
            wg = w.reshape(3, H, in_dim)
            for g in range(3):
                out = out.at[:in_dim, g * self.Hp:g * self.Hp + H].set(
                    wg[g].T.astype(jnp.bfloat16))
            return out

        def pack_bias(b):
            out = jnp.zeros((1, 3 * self.Hp), jnp.float32)
            bg = b.reshape(3, H)
            for g in range(3):
                out = out.at[0, g * self.Hp:g * self.Hp + H].set(bg[g])
            return out

        self.w_ih_p = pack_gates(w_ih, E, self.Ep)       # (Ep, 3Hp) bf16
        self.w_hh_p = pack_gates(w_hh, H, self.Hp)       # (Hp, 3Hp) bf16
        self.b_ih_p = pack_bias(b_ih)                    # (1, 3Hp)  f32
        self.b_hh_p = pack_bias(b_hh)                    # (1, 3Hp)  f32

        # FC head: weight (V, H), bias (V,) -> transposed, padded, bf16 weight.
        w_fc = scale * jax.random.normal(ks[5], (V, H), jnp.float32)
        b_fc = scale * jax.random.normal(ks[6], (V,), jnp.float32)
        self.w_fc_p = jnp.zeros((self.Hp, self.Vp), jnp.bfloat16
                                ).at[:H, :V].set(w_fc.T.astype(jnp.bfloat16))
        self.b_fc_p = jnp.zeros((1, self.Vp), jnp.float32).at[0, :V].set(b_fc)

    def _pad_inputs(self, x, h0):
        B = x.shape[0]
        # Bp = 16: full bf16 sublane packing for the MXU operands.
        Bp = _round_up(max(B, 16), 16)
        ids_p = jnp.zeros((Bp,), jnp.int32).at[:B].set(x.astype(jnp.int32))
        h_p = jnp.zeros((Bp, self.Hp), jnp.float32).at[:B, :self.H].set(h0)
        return ids_p, h_p, B

    def forward(self, x, hidden):
        # x: (B,) int32 token ids; hidden: (1, B, H) f32 (PyTorch GRU layout).
        ids_p, h_p, B = self._pad_inputs(x, hidden[0])
        pred_p, hnew_p = gru_decoder_step(
            ids_p, h_p, self.w_ih_p, self.w_hh_p, self.b_ih_p, self.b_hh_p,
            self.emb_p, self.w_fc_p, self.b_fc_p, self.tile_v)
        pred = pred_p[:B, :self.V]
        h_new = hnew_p[:B, :self.H]
        return pred, h_new[None]                         # (B, V), (1, B, H)


def _reference_forward(dec, x, hidden):
    """Pure-JAX reference mirroring the kernel numerics (bf16 weights, f32 acc)."""
    B = x.shape[0]
    ids_p, h_p, _ = dec._pad_inputs(x, hidden[0])
    Hp = dec.Hp
    x_b = jnp.take(dec.emb_p, ids_p, axis=0).astype(jnp.bfloat16)
    h_b = h_p.astype(jnp.bfloat16)
    gi = jnp.dot(x_b, dec.w_ih_p, preferred_element_type=jnp.float32) + dec.b_ih_p
    gh = jnp.dot(h_b, dec.w_hh_p, preferred_element_type=jnp.float32) + dec.b_hh_p
    r = jax.nn.sigmoid(gi[:, :Hp] + gh[:, :Hp])
    z = jax.nn.sigmoid(gi[:, Hp:2 * Hp] + gh[:, Hp:2 * Hp])
    n = jnp.tanh(gi[:, 2 * Hp:] + r * gh[:, 2 * Hp:])
    h_new = (1.0 - z) * n + z * h_p
    pred = (jnp.dot(h_new.astype(jnp.bfloat16), dec.w_fc_p,
                    preferred_element_type=jnp.float32) + dec.b_fc_p)
    return pred[:B, :dec.V], h_new[:B, :dec.H][None]


if __name__ == "__main__":
    vocab_size, emb_size, hidden_size = 64, 32, 32
    batch = 2

    key = jax.random.PRNGKey(0)
    k_params, k_tok, k_hid = jax.random.split(key, 3)

    dec = Decoder(vocab_size, emb_size, hidden_size, k_params)

    x = jax.random.randint(k_tok, (batch,), 0, vocab_size, dtype=jnp.int32)
    hidden = jax.random.normal(k_hid, (1, batch, hidden_size), jnp.float32)

    pred, h_new = dec.forward(x, hidden)
    pred = jax.block_until_ready(pred)
    h_new = jax.block_until_ready(h_new)

    assert pred.shape == (batch, vocab_size)
    assert h_new.shape == (1, batch, hidden_size)

    # Numerics check against a pure-JAX reference with identical bf16/f32 path.
    pred_ref, h_ref = _reference_forward(dec, x, hidden)
    assert jnp.allclose(pred, pred_ref, atol=1e-2, rtol=1e-2)
    assert jnp.allclose(h_new, h_ref, atol=1e-2, rtol=1e-2)

    print("KERNEL_OK")
</pallas_src>

<mosaic_0001>
module attributes {stable_mosaic.version = 11 : i64} {
  func.func @_gru_step_kernel(%arg0: memref<16xi32, #tpu.memory_space<smem>>, %arg1: memref<16x128xf32, #tpu.memory_space<vmem>>, %arg2: memref<128x384xbf16, #tpu.memory_space<vmem>>, %arg3: memref<128x384xbf16, #tpu.memory_space<vmem>>, %arg4: memref<1x384xf32, #tpu.memory_space<vmem>>, %arg5: memref<1x384xf32, #tpu.memory_space<vmem>>, %arg6: memref<64x128xf32, #tpu.memory_space<any>>, %arg7: memref<16x128xf32, #tpu.memory_space<vmem>>, %arg8: memref<16x128xbf16, #tpu.memory_space<vmem>>, %arg9: memref<16x128xf32, #tpu.memory_space<vmem>>, %arg10: memref<16x!tpu.dma_semaphore, #tpu.memory_space<semaphore_mem>>) attributes {dimension_semantics = [], scalar_prefetch = 0 : i64, scratch_operands = 2 : i64, tpu.core_type = #tpu.core_type<tc>} {
    %c0 = arith.constant 0 : index
    %0 = memref.load %arg0[%c0] : memref<16xi32, #tpu.memory_space<smem>>
    %c0_i32 = arith.constant 0 : i32
    %c0_i32_0 = arith.constant 0 : i32
    %1 = tpu.memref_slice %arg6[%0, %c0_i32_0] : memref<64x128xf32, #tpu.memory_space<any>> -> memref<1x128xf32, #tpu.memory_space<any>>
    %c0_i32_1 = arith.constant 0 : i32
    %c0_i32_2 = arith.constant 0 : i32
    %2 = tpu.memref_slice %arg9[%c0_i32_1, %c0_i32_2] : memref<16x128xf32, #tpu.memory_space<vmem>> -> memref<1x128xf32, #tpu.memory_space<vmem>>
    %3 = tpu.memref_slice %arg10[%c0_i32] : memref<16x!tpu.dma_semaphore, #tpu.memory_space<semaphore_mem>> -> memref<1x!tpu.dma_semaphore, #tpu.memory_space<semaphore_mem>>
    %4 = tpu.memref_squeeze %3 : memref<1x!tpu.dma_semaphore, #tpu.memory_space<semaphore_mem>> -> memref<!tpu.dma_semaphore, #tpu.memory_space<semaphore_mem>>
    tpu.enqueue_dma source(%1 : memref<1x128xf32, #tpu.memory_space<any>>) target(%2 : memref<1x128xf32, #tpu.memory_space<vmem>>) target_semaphore(%4 : memref<!tpu.dma_semaphore, #tpu.memory_space<semaphore_mem>>)
    %c1 = arith.constant 1 : index
    %5 = memref.load %arg0[%c1] : memref<16xi32, #tpu.memory_space<smem>>
    %c1_i32 = arith.constant 1 : i32
    %c0_i32_3 = arith.constant 0 : i32
    %6 = tpu.memref_slice %arg6[%5, %c0_i32_3] : memref<64x128xf32, #tpu.memory_space<any>> -> memref<1x128xf32, #tpu.memory_space<any>>
    %c1_i32_4 = arith.constant 1 : i32
    %c0_i32_5 = arith.constant 0 : i32
    %7 = tpu.memref_slice %arg9[%c1_i32_4, %c0_i32_5] : memref<16x128xf32, #tpu.memory_space<vmem>> -> memref<1x128xf32, #tpu.memory_space<vmem>>
    %8 = tpu.memref_slice %arg10[%c1_i32] : memref<16x!tpu.dma_semaphore, #tpu.memory_space<semaphore_mem>> -> memref<1x!tpu.dma_semaphore, #tpu.memory_space<semaphore_mem>>
    %9 = tpu.memref_squeeze %8 : memref<1x!tpu.dma_semaphore, #tpu.memory_space<semaphore_mem>> -> memref<!tpu.dma_semaphore, #tpu.memory_space<semaphore_mem>>
    tpu.enqueue_dma source(%6 : memref<1x128xf32, #tpu.memory_space<any>>) target(%7 : memref<1x128xf32, #tpu.memory_space<vmem>>) target_semaphore(%9 : memref<!tpu.dma_semaphore, #tpu.memory_space<semaphore_mem>>)
    %c2 = arith.constant 2 : index
    %10 = memref.load %arg0[%c2] : memref<16xi32, #tpu.memory_space<smem>>
    %c2_i32 = arith.constant 2 : i32
    %c0_i32_6 = arith.constant 0 : i32
    %11 = tpu.memref_slice %arg6[%10, %c0_i32_6] : memref<64x128xf32, #tpu.memory_space<any>> -> memref<1x128xf32, #tpu.memory_space<any>>
    %c2_i32_7 = arith.constant 2 : i32
    %c0_i32_8 = arith.constant 0 : i32
    %12 = tpu.memref_slice %arg9[%c2_i32_7, %c0_i32_8] : memref<16x128xf32, #tpu.memory_space<vmem>> -> memref<1x128xf32, #tpu.memory_space<vmem>>
    %13 = tpu.memref_slice %arg10[%c2_i32] : memref<16x!tpu.dma_semaphore, #tpu.memory_space<semaphore_mem>> -> memref<1x!tpu.dma_semaphore, #tpu.memory_space<semaphore_mem>>
    %14 = tpu.memref_squeeze %13 : memref<1x!tpu.dma_semaphore, #tpu.memory_space<semaphore_mem>> -> memref<!tpu.dma_semaphore, #tpu.memory_space<semaphore_mem>>
    tpu.enqueue_dma source(%11 : memref<1x128xf32, #tpu.memory_space<any>>) target(%12 : memref<1x128xf32, #tpu.memory_space<vmem>>) target_semaphore(%14 : memref<!tpu.dma_semaphore, #tpu.memory_space<semaphore_mem>>)
    %c3 = arith.constant 3 : index
    %15 = memref.load %arg0[%c3] : memref<16xi32, #tpu.memory_space<smem>>
    %c3_i32 = arith.constant 3 : i32
    %c0_i32_9 = arith.constant 0 : i32
    %16 = tpu.memref_slice %arg6[%15, %c0_i32_9] : memref<64x128xf32, #tpu.memory_space<any>> -> memref<1x128xf32, #tpu.memory_space<any>>
    %c3_i32_10 = arith.constant 3 : i32
    %c0_i32_11 = arith.constant 0 : i32
    %17 = tpu.memref_slice %arg9[%c3_i32_10, %c0_i32_11] : memref<16x128xf32, #tpu.memory_space<vmem>> -> memref<1x128xf32, #tpu.memory_space<vmem>>
    %18 = tpu.memref_slice %arg10[%c3_i32] : memref<16x!tpu.dma_semaphore, #tpu.memory_space<semaphore_mem>> -> memref<1x!tpu.dma_semaphore, #tpu.memory_space<semaphore_mem>>
    %19 = tpu.memref_squeeze %18 : memref<1x!tpu.dma_semaphore, #tpu.memory_space<semaphore_mem>> -> memref<!tpu.dma_semaphore, #tpu.memory_space<semaphore_mem>>
    tpu.enqueue_dma source(%16 : memref<1x128xf32, #tpu.memory_space<any>>) target(%17 : memref<1x128xf32, #tpu.memory_space<vmem>>) target_semaphore(%19 : memref<!tpu.dma_semaphore, #tpu.memory_space<semaphore_mem>>)
    %c4 = arith.constant 4 : index
    %20 = memref.load %arg0[%c4] : memref<16xi32, #tpu.memory_space<smem>>
    %c4_i32 = arith.constant 4 : i32
    %c0_i32_12 = arith.constant 0 : i32
    %21 = tpu.memref_slice %arg6[%20, %c0_i32_12] : memref<64x128xf32, #tpu.memory_space<any>> -> memref<1x128xf32, #tpu.memory_space<any>>
    %c4_i32_13 = arith.constant 4 : i32
    %c0_i32_14 = arith.constant 0 : i32
    %22 = tpu.memref_slice %arg9[%c4_i32_13, %c0_i32_14] : memref<16x128xf32, #tpu.memory_space<vmem>> -> memref<1x128xf32, #tpu.memory_space<vmem>>
    %23 = tpu.memref_slice %arg10[%c4_i32] : memref<16x!tpu.dma_semaphore, #tpu.memory_space<semaphore_mem>> -> memref<1x!tpu.dma_semaphore, #tpu.memory_space<semaphore_mem>>
    %24 = tpu.memref_squeeze %23 : memref<1x!tpu.dma_semaphore, #tpu.memory_space<semaphore_mem>> -> memref<!tpu.dma_semaphore, #tpu.memory_space<semaphore_mem>>
    tpu.enqueue_dma source(%21 : memref<1x128xf32, #tpu.memory_space<any>>) target(%22 : memref<1x128xf32, #tpu.memory_space<vmem>>) target_semaphore(%24 : memref<!tpu.dma_semaphore, #tpu.memory_space<semaphore_mem>>)
    %c5 = arith.constant 5 : index
    %25 = memref.load %arg0[%c5] : memref<16xi32, #tpu.memory_space<smem>>
    %c5_i32 = arith.constant 5 : i32
    %c0_i32_15 = arith.constant 0 : i32
    %26 = tpu.memref_slice %arg6[%25, %c0_i32_15] : memref<64x128xf32, #tpu.memory_space<any>> -> memref<1x128xf32, #tpu.memory_space<any>>
    %c5_i32_16 = arith.constant 5 : i32
    %c0_i32_17 = arith.constant 0 : i32
    %27 = tpu.memref_slice %arg9[%c5_i32_16, %c0_i32_17] : memref<16x128xf32, #tpu.memory_space<vmem>> -> memref<1x128xf32, #tpu.memory_space<vmem>>
    %28 = tpu.memref_slice %arg10[%c5_i32] : memref<16x!tpu.dma_semaphore, #tpu.memory_space<semaphore_mem>> -> memref<1x!tpu.dma_semaphore, #tpu.memory_space<semaphore_mem>>
    %29 = tpu.memref_squeeze %28 : memref<1x!tpu.dma_semaphore, #tpu.memory_space<semaphore_mem>> -> memref<!tpu.dma_semaphore, #tpu.memory_space<semaphore_mem>>
    tpu.enqueue_dma source(%26 : memref<1x128xf32, #tpu.memory_space<any>>) target(%27 : memref<1x128xf32, #tpu.memory_space<vmem>>) target_semaphore(%29 : memref<!tpu.dma_semaphore, #tpu.memory_space<semaphore_mem>>)
    %c6 = arith.constant 6 : index
    %30 = memref.load %arg0[%c6] : memref<16xi32, #tpu.memory_space<smem>>
    %c6_i32 = arith.constant 6 : i32
    %c0_i32_18 = arith.constant 0 : i32
    %31 = tpu.memref_slice %arg6[%30, %c0_i32_18] : memref<64x128xf32, #tpu.memory_space<any>> -> memref<1x128xf32, #tpu.memory_space<any>>
    %c6_i32_19 = arith.constant 6 : i32
    %c0_i32_20 = arith.constant 0 : i32
    %32 = tpu.memref_slice %arg9[%c6_i32_19, %c0_i32_20] : memref<16x128xf32, #tpu.memory_space<vmem>> -> memref<1x128xf32, #tpu.memory_space<vmem>>
    %33 = tpu.memref_slice %arg10[%c6_i32] : memref<16x!tpu.dma_semaphore, #tpu.memory_space<semaphore_mem>> -> memref<1x!tpu.dma_semaphore, #tpu.memory_space<semaphore_mem>>
    %34 = tpu.memref_squeeze %33 : memref<1x!tpu.dma_semaphore, #tpu.memory_space<semaphore_mem>> -> memref<!tpu.dma_semaphore, #tpu.memory_space<semaphore_mem>>
    tpu.enqueue_dma source(%31 : memref<1x128xf32, #tpu.memory_space<any>>) target(%32 : memref<1x128xf32, #tpu.memory_space<vmem>>) target_semaphore(%34 : memref<!tpu.dma_semaphore, #tpu.memory_space<semaphore_mem>>)
    %c7 = arith.constant 7 : index
    %35 = memref.load %arg0[%c7] : memref<16xi32, #tpu.memory_space<smem>>
    %c7_i32 = arith.constant 7 : i32
    %c0_i32_21 = arith.constant 0 : i32
    %36 = tpu.memref_slice %arg6[%35, %c0_i32_21] : memref<64x128xf32, #tpu.memory_space<any>> -> memref<1x128xf32, #tpu.memory_space<any>>
    %c7_i32_22 = arith.constant 7 : i32
    %c0_i32_23 = arith.constant 0 : i32
    %37 = tpu.memref_slice %arg9[%c7_i32_22, %c0_i32_23] : memref<16x128xf32, #tpu.memory_space<vmem>> -> memref<1x128xf32, #tpu.memory_space<vmem>>
    %38 = tpu.memref_slice %arg10[%c7_i32] : memref<16x!tpu.dma_semaphore, #tpu.memory_space<semaphore_mem>> -> memref<1x!tpu.dma_semaphore, #tpu.memory_space<semaphore_mem>>
    %39 = tpu.memref_squeeze %38 : memref<1x!tpu.dma_semaphore, #tpu.memory_space<semaphore_mem>> -> memref<!tpu.dma_semaphore, #tpu.memory_space<semaphore_mem>>
    tpu.enqueue_dma source(%36 : memref<1x128xf32, #tpu.memory_space<any>>) target(%37 : memref<1x128xf32, #tpu.memory_space<vmem>>) target_semaphore(%39 : memref<!tpu.dma_semaphore, #tpu.memory_space<semaphore_mem>>)
    %c8 = arith.constant 8 : index
    %40 = memref.load %arg0[%c8] : memref<16xi32, #tpu.memory_space<smem>>
    %c8_i32 = arith.constant 8 : i32
    %c0_i32_24 = arith.constant 0 : i32
    %41 = tpu.memref_slice %arg6[%40, %c0_i32_24] : memref<64x128xf32, #tpu.memory_space<any>> -> memref<1x128xf32, #tpu.memory_space<any>>
    %c8_i32_25 = arith.constant 8 : i32
    %c0_i32_26 = arith.constant 0 : i32
    %42 = tpu.memref_slice %arg9[%c8_i32_25, %c0_i32_26] : memref<16x128xf32, #tpu.memory_space<vmem>> -> memref<1x128xf32, #tpu.memory_space<vmem>>
    %43 = tpu.memref_slice %arg10[%c8_i32] : memref<16x!tpu.dma_semaphore, #tpu.memory_space<semaphore_mem>> -> memref<1x!tpu.dma_semaphore, #tpu.memory_space<semaphore_mem>>
    %44 = tpu.memref_squeeze %43 : memref<1x!tpu.dma_semaphore, #tpu.memory_space<semaphore_mem>> -> memref<!tpu.dma_semaphore, #tpu.memory_space<semaphore_mem>>
    tpu.enqueue_dma source(%41 : memref<1x128xf32, #tpu.memory_space<any>>) target(%42 : memref<1x128xf32, #tpu.memory_space<vmem>>) target_semaphore(%44 : memref<!tpu.dma_semaphore, #tpu.memory_space<semaphore_mem>>)
    %c9 = arith.constant 9 : index
    %45 = memref.load %arg0[%c9] : memref<16xi32, #tpu.memory_space<smem>>
    %c9_i32 = arith.constant 9 : i32
    %c0_i32_27 = arith.constant 0 : i32
    %46 = tpu.memref_slice %arg6[%45, %c0_i32_27] : memref<64x128xf32, #tpu.memory_space<any>> -> memref<1x128xf32, #tpu.memory_space<any>>
    %c9_i32_28 = arith.constant 9 : i32
    %c0_i32_29 = arith.constant 0 : i32
    %47 = tpu.memref_slice %arg9[%c9_i32_28, %c0_i32_29] : memref<16x128xf32, #tpu.memory_space<vmem>> -> memref<1x128xf32, #tpu.memory_space<vmem>>
    %48 = tpu.memref_slice %arg10[%c9_i32] : memref<16x!tpu.dma_semaphore, #tpu.memory_space<semaphore_mem>> -> memref<1x!tpu.dma_semaphore, #tpu.memory_space<semaphore_mem>>
    %49 = tpu.memref_squeeze %48 : memref<1x!tpu.dma_semaphore, #tpu.memory_space<semaphore_mem>> -> memref<!tpu.dma_semaphore, #tpu.memory_space<semaphore_mem>>
    tpu.enqueue_dma source(%46 : memref<1x128xf32, #tpu.memory_space<any>>) target(%47 : memref<1x128xf32, #tpu.memory_space<vmem>>) target_semaphore(%49 : memref<!tpu.dma_semaphore, #tpu.memory_space<semaphore_mem>>)
    %c10 = arith.constant 10 : index
    %50 = memref.load %arg0[%c10] : memref<16xi32, #tpu.memory_space<smem>>
    %c10_i32 = arith.constant 10 : i32
    %c0_i32_30 = arith.constant 0 : i32
    %51 = tpu.memref_slice %arg6[%50, %c0_i32_30] : memref<64x128xf32, #tpu.memory_space<any>> -> memref<1x128xf32, #tpu.memory_space<any>>
    %c10_i32_31 = arith.constant 10 : i32
    %c0_i32_32 = arith.constant 0 : i32
    %52 = tpu.memref_slice %arg9[%c10_i32_31, %c0_i32_32] : memref<16x128xf32, #tpu.memory_space<vmem>> -> memref<1x128xf32, #tpu.memory_space<vmem>>
    %53 = tpu.memref_slice %arg10[%c10_i32] : memref<16x!tpu.dma_semaphore, #tpu.memory_space<semaphore_mem>> -> memref<1x!tpu.dma_semaphore, #tpu.memory_space<semaphore_mem>>
    %54 = tpu.memref_squeeze %53 : memref<1x!tpu.dma_semaphore, #tpu.memory_space<semaphore_mem>> -> memref<!tpu.dma_semaphore, #tpu.memory_space<semaphore_mem>>
    tpu.enqueue_dma source(%51 : memref<1x128xf32, #tpu.memory_space<any>>) target(%52 : memref<1x128xf32, #tpu.memory_space<vmem>>) target_semaphore(%54 : memref<!tpu.dma_semaphore, #tpu.memory_space<semaphore_mem>>)
    %c11 = arith.constant 11 : index
    %55 = memref.load %arg0[%c11] : memref<16xi32, #tpu.memory_space<smem>>
    %c11_i32 = arith.constant 11 : i32
    %c0_i32_33 = arith.constant 0 : i32
    %56 = tpu.memref_slice %arg6[%55, %c0_i32_33] : memref<64x128xf32, #tpu.memory_space<any>> -> memref<1x128xf32, #tpu.memory_space<any>>
    %c11_i32_34 = arith.constant 11 : i32
    %c0_i32_35 = arith.constant 0 : i32
    %57 = tpu.memref_slice %arg9[%c11_i32_34, %c0_i32_35] : memref<16x128xf32, #tpu.memory_space<vmem>> -> memref<1x128xf32, #tpu.memory_space<vmem>>
    %58 = tpu.memref_slice %arg10[%c11_i32] : memref<16x!tpu.dma_semaphore, #tpu.memory_space<semaphore_mem>> -> memref<1x!tpu.dma_semaphore, #tpu.memory_space<semaphore_mem>>
    %59 = tpu.memref_squeeze %58 : memref<1x!tpu.dma_semaphore, #tpu.memory_space<semaphore_mem>> -> memref<!tpu.dma_semaphore, #tpu.memory_space<semaphore_mem>>
    tpu.enqueue_dma source(%56 : memref<1x128xf32, #tpu.memory_space<any>>) target(%57 : memref<1x128xf32, #tpu.memory_space<vmem>>) target_semaphore(%59 : memref<!tpu.dma_semaphore, #tpu.memory_space<semaphore_mem>>)
    %c12 = arith.constant 12 : index
    %60 = memref.load %arg0[%c12] : memref<16xi32, #tpu.memory_space<smem>>
    %c12_i32 = arith.constant 12 : i32
    %c0_i32_36 = arith.constant 0 : i32
    %61 = tpu.memref_slice %arg6[%60, %c0_i32_36] : memref<64x128xf32, #tpu.memory_space<any>> -> memref<1x128xf32, #tpu.memory_space<any>>
    %c12_i32_37 = arith.constant 12 : i32
    %c0_i32_38 = arith.constant 0 : i32
    %62 = tpu.memref_slice %arg9[%c12_i32_37, %c0_i32_38] : memref<16x128xf32, #tpu.memory_space<vmem>> -> memref<1x128xf32, #tpu.memory_space<vmem>>
    %63 = tpu.memref_slice %arg10[%c12_i32] : memref<16x!tpu.dma_semaphore, #tpu.memory_space<semaphore_mem>> -> memref<1x!tpu.dma_semaphore, #tpu.memory_space<semaphore_mem>>
    %64 = tpu.memref_squeeze %63 : memref<1x!tpu.dma_semaphore, #tpu.memory_space<semaphore_mem>> -> memref<!tpu.dma_semaphore, #tpu.memory_space<semaphore_mem>>
    tpu.enqueue_dma source(%61 : memref<1x128xf32, #tpu.memory_space<any>>) target(%62 : memref<1x128xf32, #tpu.memory_space<vmem>>) target_semaphore(%64 : memref<!tpu.dma_semaphore, #tpu.memory_space<semaphore_mem>>)
    %c13 = arith.constant 13 : index
    %65 = memref.load %arg0[%c13] : memref<16xi32, #tpu.memory_space<smem>>
    %c13_i32 = arith.constant 13 : i32
    %c0_i32_39 = arith.constant 0 : i32
    %66 = tpu.memref_slice %arg6[%65, %c0_i32_39] : memref<64x128xf32, #tpu.memory_space<any>> -> memref<1x128xf32, #tpu.memory_space<any>>
    %c13_i32_40 = arith.constant 13 : i32
    %c0_i32_41 = arith.constant 0 : i32
    %67 = tpu.memref_slice %arg9[%c13_i32_40, %c0_i32_41] : memref<16x128xf32, #tpu.memory_space<vmem>> -> memref<1x128xf32, #tpu.memory_space<vmem>>
    %68 = tpu.memref_slice %arg10[%c13_i32] : memref<16x!tpu.dma_semaphore, #tpu.memory_space<semaphore_mem>> -> memref<1x!tpu.dma_semaphore, #tpu.memory_space<semaphore_mem>>
    %69 = tpu.memref_squeeze %68 : memref<1x!tpu.dma_semaphore, #tpu.memory_space<semaphore_mem>> -> memref<!tpu.dma_semaphore, #tpu.memory_space<semaphore_mem>>
    tpu.enqueue_dma source(%66 : memref<1x128xf32, #tpu.memory_space<any>>) target(%67 : memref<1x128xf32, #tpu.memory_space<vmem>>) target_semaphore(%69 : memref<!tpu.dma_semaphore, #tpu.memory_space<semaphore_mem>>)
    %c14 = arith.constant 14 : index
    %70 = memref.load %arg0[%c14] : memref<16xi32, #tpu.memory_space<smem>>
    %c14_i32 = arith.constant 14 : i32
    %c0_i32_42 = arith.constant 0 : i32
    %71 = tpu.memref_slice %arg6[%70, %c0_i32_42] : memref<64x128xf32, #tpu.memory_space<any>> -> memref<1x128xf32, #tpu.memory_space<any>>
    %c14_i32_43 = arith.constant 14 : i32
    %c0_i32_44 = arith.constant 0 : i32
    %72 = tpu.memref_slice %arg9[%c14_i32_43, %c0_i32_44] : memref<16x128xf32, #tpu.memory_space<vmem>> -> memref<1x128xf32, #tpu.memory_space<vmem>>
    %73 = tpu.memref_slice %arg10[%c14_i32] : memref<16x!tpu.dma_semaphore, #tpu.memory_space<semaphore_mem>> -> memref<1x!tpu.dma_semaphore, #tpu.memory_space<semaphore_mem>>
    %74 = tpu.memref_squeeze %73 : memref<1x!tpu.dma_semaphore, #tpu.memory_space<semaphore_mem>> -> memref<!tpu.dma_semaphore, #tpu.memory_space<semaphore_mem>>
    tpu.enqueue_dma source(%71 : memref<1x128xf32, #tpu.memory_space<any>>) target(%72 : memref<1x128xf32, #tpu.memory_space<vmem>>) target_semaphore(%74 : memref<!tpu.dma_semaphore, #tpu.memory_space<semaphore_mem>>)
    %c15 = arith.constant 15 : index
    %75 = memref.load %arg0[%c15] : memref<16xi32, #tpu.memory_space<smem>>
    %c15_i32 = arith.constant 15 : i32
    %c0_i32_45 = arith.constant 0 : i32
    %76 = tpu.memref_slice %arg6[%75, %c0_i32_45] : memref<64x128xf32, #tpu.memory_space<any>> -> memref<1x128xf32, #tpu.memory_space<any>>
    %c15_i32_46 = arith.constant 15 : i32
    %c0_i32_47 = arith.constant 0 : i32
    %77 = tpu.memref_slice %arg9[%c15_i32_46, %c0_i32_47] : memref<16x128xf32, #tpu.memory_space<vmem>> -> memref<1x128xf32, #tpu.memory_space<vmem>>
    %78 = tpu.memref_slice %arg10[%c15_i32] : memref<16x!tpu.dma_semaphore, #tpu.memory_space<semaphore_mem>> -> memref<1x!tpu.dma_semaphore, #tpu.memory_space<semaphore_mem>>
    %79 = tpu.memref_squeeze %78 : memref<1x!tpu.dma_semaphore, #tpu.memory_space<semaphore_mem>> -> memref<!tpu.dma_semaphore, #tpu.memory_space<semaphore_mem>>
    tpu.enqueue_dma source(%76 : memref<1x128xf32, #tpu.memory_space<any>>) target(%77 : memref<1x128xf32, #tpu.memory_space<vmem>>) target_semaphore(%79 : memref<!tpu.dma_semaphore, #tpu.memory_space<semaphore_mem>>)
    %c0_i32_48 = arith.constant 0 : i32
    %c0_i32_49 = arith.constant 0 : i32
    %80 = tpu.memref_slice %arg6[%0, %c0_i32_49] : memref<64x128xf32, #tpu.memory_space<any>> -> memref<1x128xf32, #tpu.memory_space<any>>
    %c0_i32_50 = arith.constant 0 : i32
    %c0_i32_51 = arith.constant 0 : i32
    %81 = tpu.memref_slice %arg9[%c0_i32_50, %c0_i32_51] : memref<16x128xf32, #tpu.memory_space<vmem>> -> memref<1x128xf32, #tpu.memory_space<vmem>>
    %82 = tpu.memref_slice %arg10[%c0_i32_48] : memref<16x!tpu.dma_semaphore, #tpu.memory_space<semaphore_mem>> -> memref<1x!tpu.dma_semaphore, #tpu.memory_space<semaphore_mem>>
    %83 = tpu.memref_squeeze %82 : memref<1x!tpu.dma_semaphore, #tpu.memory_space<semaphore_mem>> -> memref<!tpu.dma_semaphore, #tpu.memory_space<semaphore_mem>>
    tpu.wait_dma2 semaphore(%83 : memref<!tpu.dma_semaphore, #tpu.memory_space<semaphore_mem>>) src(%80 : memref<1x128xf32, #tpu.memory_space<any>>) dst(%81 : memref<1x128xf32, #tpu.memory_space<vmem>>)
    %c1_i32_52 = arith.constant 1 : i32
    %c0_i32_53 = arith.constant 0 : i32
    %84 = tpu.memref_slice %arg6[%5, %c0_i32_53] : memref<64x128xf32, #tpu.memory_space<any>> -> memref<1x128xf32, #tpu.memory_space<any>>
    %c1_i32_54 = arith.constant 1 : i32
    %c0_i32_55 = arith.constant 0 : i32
    %85 = tpu.memref_slice %arg9[%c1_i32_54, %c0_i32_55] : memref<16x128xf32, #tpu.memory_space<vmem>> -> memref<1x128xf32, #tpu.memory_space<vmem>>
    %86 = tpu.memref_slice %arg10[%c1_i32_52] : memref<16x!tpu.dma_semaphore, #tpu.memory_space<semaphore_mem>> -> memref<1x!tpu.dma_semaphore, #tpu.memory_space<semaphore_mem>>
    %87 = tpu.memref_squeeze %86 : memref<1x!tpu.dma_semaphore, #tpu.memory_space<semaphore_mem>> -> memref<!tpu.dma_semaphore, #tpu.memory_space<semaphore_mem>>
    tpu.wait_dma2 semaphore(%87 : memref<!tpu.dma_semaphore, #tpu.memory_space<semaphore_mem>>) src(%84 : memref<1x128xf32, #tpu.memory_space<any>>) dst(%85 : memref<1x128xf32, #tpu.memory_space<vmem>>)
    %c2_i32_56 = arith.constant 2 : i32
    %c0_i32_57 = arith.constant 0 : i32
    %88 = tpu.memref_slice %arg6[%10, %c0_i32_57] : memref<64x128xf32, #tpu.memory_space<any>> -> memref<1x128xf32, #tpu.memory_space<any>>
    %c2_i32_58 = arith.constant 2 : i32
    %c0_i32_59 = arith.constant 0 : i32
    %89 = tpu.memref_slice %arg9[%c2_i32_58, %c0_i32_59] : memref<16x128xf32, #tpu.memory_space<vmem>> -> memref<1x128xf32, #tpu.memory_space<vmem>>
    %90 = tpu.memref_slice %arg10[%c2_i32_56] : memref<16x!tpu.dma_semaphore, #tpu.memory_space<semaphore_mem>> -> memref<1x!tpu.dma_semaphore, #tpu.memory_space<semaphore_mem>>
    %91 = tpu.memref_squeeze %90 : memref<1x!tpu.dma_semaphore, #tpu.memory_space<semaphore_mem>> -> memref<!tpu.dma_semaphore, #tpu.memory_space<semaphore_mem>>
    tpu.wait_dma2 semaphore(%91 : memref<!tpu.dma_semaphore, #tpu.memory_space<semaphore_mem>>) src(%88 : memref<1x128xf32, #tpu.memory_space<any>>) dst(%89 : memref<1x128xf32, #tpu.memory_space<vmem>>)
    %c3_i32_60 = arith.constant 3 : i32
    %c0_i32_61 = arith.constant 0 : i32
    %92 = tpu.memref_slice %arg6[%15, %c0_i32_61] : memref<64x128xf32, #tpu.memory_space<any>> -> memref<1x128xf32, #tpu.memory_space<any>>
    %c3_i32_62 = arith.constant 3 : i32
    %c0_i32_63 = arith.constant 0 : i32
    %93 = tpu.memref_slice %arg9[%c3_i32_62, %c0_i32_63] : memref<16x128xf32, #tpu.memory_space<vmem>> -> memref<1x128xf32, #tpu.memory_space<vmem>>
    %94 = tpu.memref_slice %arg10[%c3_i32_60] : memref<16x!tpu.dma_semaphore, #tpu.memory_space<semaphore_mem>> -> memref<1x!tpu.dma_semaphore, #tpu.memory_space<semaphore_mem>>
    %95 = tpu.memref_squeeze %94 : memref<1x!tpu.dma_semaphore, #tpu.memory_space<semaphore_mem>> -> memref<!tpu.dma_semaphore, #tpu.memory_space<semaphore_mem>>
    tpu.wait_dma2 semaphore(%95 : memref<!tpu.dma_semaphore, #tpu.memory_space<semaphore_mem>>) src(%92 : memref<1x128xf32, #tpu.memory_space<any>>) dst(%93 : memref<1x128xf32, #tpu.memory_space<vmem>>)
    %c4_i32_64 = arith.constant 4 : i32
    %c0_i32_65 = arith.constant 0 : i32
    %96 = tpu.memref_slice %arg6[%20, %c0_i32_65] : memref<64x128xf32, #tpu.memory_space<any>> -> memref<1x128xf32, #tpu.memory_space<any>>
    %c4_i32_66 = arith.constant 4 : i32
    %c0_i32_67 = arith.constant 0 : i32
    %97 = tpu.memref_slice %arg9[%c4_i32_66, %c0_i32_67] : memref<16x128xf32, #tpu.memory_space<vmem>> -> memref<1x128xf32, #tpu.memory_space<vmem>>
    %98 = tpu.memref_slice %arg10[%c4_i32_64] : memref<16x!tpu.dma_semaphore, #tpu.memory_space<semaphore_mem>> -> memref<1x!tpu.dma_semaphore, #tpu.memory_space<semaphore_mem>>
    %99 = tpu.memref_squeeze %98 : memref<1x!tpu.dma_semaphore, #tpu.memory_space<semaphore_mem>> -> memref<!tpu.dma_semaphore, #tpu.memory_space<semaphore_mem>>
    tpu.wait_dma2 semaphore(%99 : memref<!tpu.dma_semaphore, #tpu.memory_space<semaphore_mem>>) src(%96 : memref<1x128xf32, #tpu.memory_space<any>>) dst(%97 : memref<1x128xf32, #tpu.memory_space<vmem>>)
    %c5_i32_68 = arith.constant 5 : i32
    %c0_i32_69 = arith.constant 0 : i32
    %100 = tpu.memref_slice %arg6[%25, %c0_i32_69] : memref<64x128xf32, #tpu.memory_space<any>> -> memref<1x128xf32, #tpu.memory_space<any>>
    %c5_i32_70 = arith.constant 5 : i32
    %c0_i32_71 = arith.constant 0 : i32
    %101 = tpu.memref_slice %arg9[%c5_i32_70, %c0_i32_71] : memref<16x128xf32, #tpu.memory_space<vmem>> -> memref<1x128xf32, #tpu.memory_space<vmem>>
    %102 = tpu.memref_slice %arg10[%c5_i32_68] : memref<16x!tpu.dma_semaphore, #tpu.memory_space<semaphore_mem>> -> memref<1x!tpu.dma_semaphore, #tpu.memory_space<semaphore_mem>>
    %103 = tpu.memref_squeeze %102 : memref<1x!tpu.dma_semaphore, #tpu.memory_space<semaphore_mem>> -> memref<!tpu.dma_semaphore, #tpu.memory_space<semaphore_mem>>
    tpu.wait_dma2 semaphore(%103 : memref<!tpu.dma_semaphore, #tpu.memory_space<semaphore_mem>>) src(%100 : memref<1x128xf32, #tpu.memory_space<any>>) dst(%101 : memref<1x128xf32, #tpu.memory_space<vmem>>)
    %c6_i32_72 = arith.constant 6 : i32
    %c0_i32_73 = arith.constant 0 : i32
    %104 = tpu.memref_slice %arg6[%30, %c0_i32_73] : memref<64x128xf32, #tpu.memory_space<any>> -> memref<1x128xf32, #tpu.memory_space<any>>
    %c6_i32_74 = arith.constant 6 : i32
    %c0_i32_75 = arith.constant 0 : i32
    %105 = tpu.memref_slice %arg9[%c6_i32_74, %c0_i32_75] : memref<16x128xf32, #tpu.memory_space<vmem>> -> memref<1x128xf32, #tpu.memory_space<vmem>>
    %106 = tpu.memref_slice %arg10[%c6_i32_72] : memref<16x!tpu.dma_semaphore, #tpu.memory_space<semaphore_mem>> -> memref<1x!tpu.dma_semaphore, #tpu.memory_space<semaphore_mem>>
    %107 = tpu.memref_squeeze %106 : memref<1x!tpu.dma_semaphore, #tpu.memory_space<semaphore_mem>> -> memref<!tpu.dma_semaphore, #tpu.memory_space<semaphore_mem>>
    tpu.wait_dma2 semaphore(%107 : memref<!tpu.dma_semaphore, #tpu.memory_space<semaphore_mem>>) src(%104 : memref<1x128xf32, #tpu.memory_space<any>>) dst(%105 : memref<1x128xf32, #tpu.memory_space<vmem>>)
    %c7_i32_76 = arith.constant 7 : i32
    %c0_i32_77 = arith.constant 0 : i32
    %108 = tpu.memref_slice %arg6[%35, %c0_i32_77] : memref<64x128xf32, #tpu.memory_space<any>> -> memref<1x128xf32, #tpu.memory_space<any>>
    %c7_i32_78 = arith.constant 7 : i32
    %c0_i32_79 = arith.constant 0 : i32
    %109 = tpu.memref_slice %arg9[%c7_i32_78, %c0_i32_79] : memref<16x128xf32, #tpu.memory_space<vmem>> -> memref<1x128xf32, #tpu.memory_space<vmem>>
    %110 = tpu.memref_slice %arg10[%c7_i32_76] : memref<16x!tpu.dma_semaphore, #tpu.memory_space<semaphore_mem>> -> memref<1x!tpu.dma_semaphore, #tpu.memory_space<semaphore_mem>>
    %111 = tpu.memref_squeeze %110 : memref<1x!tpu.dma_semaphore, #tpu.memory_space<semaphore_mem>> -> memref<!tpu.dma_semaphore, #tpu.memory_space<semaphore_mem>>
    tpu.wait_dma2 semaphore(%111 : memref<!tpu.dma_semaphore, #tpu.memory_space<semaphore_mem>>) src(%108 : memref<1x128xf32, #tpu.memory_space<any>>) dst(%109 : memref<1x128xf32, #tpu.memory_space<vmem>>)
    %c8_i32_80 = arith.constant 8 : i32
    %c0_i32_81 = arith.constant 0 : i32
    %112 = tpu.memref_slice %arg6[%40, %c0_i32_81] : memref<64x128xf32, #tpu.memory_space<any>> -> memref<1x128xf32, #tpu.memory_space<any>>
    %c8_i32_82 = arith.constant 8 : i32
    %c0_i32_83 = arith.constant 0 : i32
    %113 = tpu.memref_slice %arg9[%c8_i32_82, %c0_i32_83] : memref<16x128xf32, #tpu.memory_space<vmem>> -> memref<1x128xf32, #tpu.memory_space<vmem>>
    %114 = tpu.memref_slice %arg10[%c8_i32_80] : memref<16x!tpu.dma_semaphore, #tpu.memory_space<semaphore_mem>> -> memref<1x!tpu.dma_semaphore, #tpu.memory_space<semaphore_mem>>
    %115 = tpu.memref_squeeze %114 : memref<1x!tpu.dma_semaphore, #tpu.memory_space<semaphore_mem>> -> memref<!tpu.dma_semaphore, #tpu.memory_space<semaphore_mem>>
    tpu.wait_dma2 semaphore(%115 : memref<!tpu.dma_semaphore, #tpu.memory_space<semaphore_mem>>) src(%112 : memref<1x128xf32, #tpu.memory_space<any>>) dst(%113 : memref<1x128xf32, #tpu.memory_space<vmem>>)
    %c9_i32_84 = arith.constant 9 : i32
    %c0_i32_85 = arith.constant 0 : i32
    %116 = tpu.memref_slice %arg6[%45, %c0_i32_85] : memref<64x128xf32, #tpu.memory_space<any>> -> memref<1x128xf32, #tpu.memory_space<any>>
    %c9_i32_86 = arith.constant 9 : i32
    %c0_i32_87 = arith.constant 0 : i32
    %117 = tpu.memref_slice %arg9[%c9_i32_86, %c0_i32_87] : memref<16x128xf32, #tpu.memory_space<vmem>> -> memref<1x128xf32, #tpu.memory_space<vmem>>
    %118 = tpu.memref_slice %arg10[%c9_i32_84] : memref<16x!tpu.dma_semaphore, #tpu.memory_space<semaphore_mem>> -> memref<1x!tpu.dma_semaphore, #tpu.memory_space<semaphore_mem>>
    %119 = tpu.memref_squeeze %118 : memref<1x!tpu.dma_semaphore, #tpu.memory_space<semaphore_mem>> -> memref<!tpu.dma_semaphore, #tpu.memory_space<semaphore_mem>>
    tpu.wait_dma2 semaphore(%119 : memref<!tpu.dma_semaphore, #tpu.memory_space<semaphore_mem>>) src(%116 : memref<1x128xf32, #tpu.memory_space<any>>) dst(%117 : memref<1x128xf32, #tpu.memory_space<vmem>>)
    %c10_i32_88 = arith.constant 10 : i32
    %c0_i32_89 = arith.constant 0 : i32
    %120 = tpu.memref_slice %arg6[%50, %c0_i32_89] : memref<64x128xf32, #tpu.memory_space<any>> -> memref<1x128xf32, #tpu.memory_space<any>>
    %c10_i32_90 = arith.constant 10 : i32
    %c0_i32_91 = arith.constant 0 : i32
    %121 = tpu.memref_slice %arg9[%c10_i32_90, %c0_i32_91] : memref<16x128xf32, #tpu.memory_space<vmem>> -> memref<1x128xf32, #tpu.memory_space<vmem>>
    %122 = tpu.memref_slice %arg10[%c10_i32_88] : memref<16x!tpu.dma_semaphore, #tpu.memory_space<semaphore_mem>> -> memref<1x!tpu.dma_semaphore, #tpu.memory_space<semaphore_mem>>
    %123 = tpu.memref_squeeze %122 : memref<1x!tpu.dma_semaphore, #tpu.memory_space<semaphore_mem>> -> memref<!tpu.dma_semaphore, #tpu.memory_space<semaphore_mem>>
    tpu.wait_dma2 semaphore(%123 : memref<!tpu.dma_semaphore, #tpu.memory_space<semaphore_mem>>) src(%120 : memref<1x128xf32, #tpu.memory_space<any>>) dst(%121 : memref<1x128xf32, #tpu.memory_space<vmem>>)
    %c11_i32_92 = arith.constant 11 : i32
    %c0_i32_93 = arith.constant 0 : i32
    %124 = tpu.memref_slice %arg6[%55, %c0_i32_93] : memref<64x128xf32, #tpu.memory_space<any>> -> memref<1x128xf32, #tpu.memory_space<any>>
    %c11_i32_94 = arith.constant 11 : i32
    %c0_i32_95 = arith.constant 0 : i32
    %125 = tpu.memref_slice %arg9[%c11_i32_94, %c0_i32_95] : memref<16x128xf32, #tpu.memory_space<vmem>> -> memref<1x128xf32, #tpu.memory_space<vmem>>
    %126 = tpu.memref_slice %arg10[%c11_i32_92] : memref<16x!tpu.dma_semaphore, #tpu.memory_space<semaphore_mem>> -> memref<1x!tpu.dma_semaphore, #tpu.memory_space<semaphore_mem>>
    %127 = tpu.memref_squeeze %126 : memref<1x!tpu.dma_semaphore, #tpu.memory_space<semaphore_mem>> -> memref<!tpu.dma_semaphore, #tpu.memory_space<semaphore_mem>>
    tpu.wait_dma2 semaphore(%127 : memref<!tpu.dma_semaphore, #tpu.memory_space<semaphore_mem>>) src(%124 : memref<1x128xf32, #tpu.memory_space<any>>) dst(%125 : memref<1x128xf32, #tpu.memory_space<vmem>>)
    %c12_i32_96 = arith.constant 12 : i32
    %c0_i32_97 = arith.constant 0 : i32
    %128 = tpu.memref_slice %arg6[%60, %c0_i32_97] : memref<64x128xf32, #tpu.memory_space<any>> -> memref<1x128xf32, #tpu.memory_space<any>>
    %c12_i32_98 = arith.constant 12 : i32
    %c0_i32_99 = arith.constant 0 : i32
    %129 = tpu.memref_slice %arg9[%c12_i32_98, %c0_i32_99] : memref<16x128xf32, #tpu.memory_space<vmem>> -> memref<1x128xf32, #tpu.memory_space<vmem>>
    %130 = tpu.memref_slice %arg10[%c12_i32_96] : memref<16x!tpu.dma_semaphore, #tpu.memory_space<semaphore_mem>> -> memref<1x!tpu.dma_semaphore, #tpu.memory_space<semaphore_mem>>
    %131 = tpu.memref_squeeze %130 : memref<1x!tpu.dma_semaphore, #tpu.memory_space<semaphore_mem>> -> memref<!tpu.dma_semaphore, #tpu.memory_space<semaphore_mem>>
    tpu.wait_dma2 semaphore(%131 : memref<!tpu.dma_semaphore, #tpu.memory_space<semaphore_mem>>) src(%128 : memref<1x128xf32, #tpu.memory_space<any>>) dst(%129 : memref<1x128xf32, #tpu.memory_space<vmem>>)
    %c13_i32_100 = arith.constant 13 : i32
    %c0_i32_101 = arith.constant 0 : i32
    %132 = tpu.memref_slice %arg6[%65, %c0_i32_101] : memref<64x128xf32, #tpu.memory_space<any>> -> memref<1x128xf32, #tpu.memory_space<any>>
    %c13_i32_102 = arith.constant 13 : i32
    %c0_i32_103 = arith.constant 0 : i32
    %133 = tpu.memref_slice %arg9[%c13_i32_102, %c0_i32_103] : memref<16x128xf32, #tpu.memory_space<vmem>> -> memref<1x128xf32, #tpu.memory_space<vmem>>
    %134 = tpu.memref_slice %arg10[%c13_i32_100] : memref<16x!tpu.dma_semaphore, #tpu.memory_space<semaphore_mem>> -> memref<1x!tpu.dma_semaphore, #tpu.memory_space<semaphore_mem>>
    %135 = tpu.memref_squeeze %134 : memref<1x!tpu.dma_semaphore, #tpu.memory_space<semaphore_mem>> -> memref<!tpu.dma_semaphore, #tpu.memory_space<semaphore_mem>>
    tpu.wait_dma2 semaphore(%135 : memref<!tpu.dma_semaphore, #tpu.memory_space<semaphore_mem>>) src(%132 : memref<1x128xf32, #tpu.memory_space<any>>) dst(%133 : memref<1x128xf32, #tpu.memory_space<vmem>>)
    %c14_i32_104 = arith.constant 14 : i32
    %c0_i32_105 = arith.constant 0 : i32
    %136 = tpu.memref_slice %arg6[%70, %c0_i32_105] : memref<64x128xf32, #tpu.memory_space<any>> -> memref<1x128xf32, #tpu.memory_space<any>>
    %c14_i32_106 = arith.constant 14 : i32
    %c0_i32_107 = arith.constant 0 : i32
    %137 = tpu.memref_slice %arg9[%c14_i32_106, %c0_i32_107] : memref<16x128xf32, #tpu.memory_space<vmem>> -> memref<1x128xf32, #tpu.memory_space<vmem>>
    %138 = tpu.memref_slice %arg10[%c14_i32_104] : memref<16x!tpu.dma_semaphore, #tpu.memory_space<semaphore_mem>> -> memref<1x!tpu.dma_semaphore, #tpu.memory_space<semaphore_mem>>
    %139 = tpu.memref_squeeze %138 : memref<1x!tpu.dma_semaphore, #tpu.memory_space<semaphore_mem>> -> memref<!tpu.dma_semaphore, #tpu.memory_space<semaphore_mem>>
    tpu.wait_dma2 semaphore(%139 : memref<!tpu.dma_semaphore, #tpu.memory_space<semaphore_mem>>) src(%136 : memref<1x128xf32, #tpu.memory_space<any>>) dst(%137 : memref<1x128xf32, #tpu.memory_space<vmem>>)
    %c15_i32_108 = arith.constant 15 : i32
    %c0_i32_109 = arith.constant 0 : i32
    %140 = tpu.memref_slice %arg6[%75, %c0_i32_109] : memref<64x128xf32, #tpu.memory_space<any>> -> memref<1x128xf32, #tpu.memory_space<any>>
    %c15_i32_110 = arith.constant 15 : i32
    %c0_i32_111 = arith.constant 0 : i32
    %141 = tpu.memref_slice %arg9[%c15_i32_110, %c0_i32_111] : memref<16x128xf32, #tpu.memory_space<vmem>> -> memref<1x128xf32, #tpu.memory_space<vmem>>
    %142 = tpu.memref_slice %arg10[%c15_i32_108] : memref<16x!tpu.dma_semaphore, #tpu.memory_space<semaphore_mem>> -> memref<1x!tpu.dma_semaphore, #tpu.memory_space<semaphore_mem>>
    %143 = tpu.memref_squeeze %142 : memref<1x!tpu.dma_semaphore, #tpu.memory_space<semaphore_mem>> -> memref<!tpu.dma_semaphore, #tpu.memory_space<semaphore_mem>>
    tpu.wait_dma2 semaphore(%143 : memref<!tpu.dma_semaphore, #tpu.memory_space<semaphore_mem>>) src(%140 : memref<1x128xf32, #tpu.memory_space<any>>) dst(%141 : memref<1x128xf32, #tpu.memory_space<vmem>>)
    %c0_112 = arith.constant 0 : index
    %c0_113 = arith.constant 0 : index
    %144 = vector.load %arg9[%c0_112, %c0_113] : memref<16x128xf32, #tpu.memory_space<vmem>>, vector<16x128xf32>
    %145 = arith.truncf %144 : vector<16x128xf32> to vector<16x128xbf16>
    %c0_114 = arith.constant 0 : index
    %c0_115 = arith.constant 0 : index
    %146 = vector.load %arg1[%c0_114, %c0_115] : memref<16x128xf32, #tpu.memory_space<vmem>>, vector<16x128xf32>
    %147 = arith.truncf %146 : vector<16x128xf32> to vector<16x128xbf16>
    %c0_116 = arith.constant 0 : index
    %c0_117 = arith.constant 0 : index
    %148 = vector.load %arg2[%c0_116, %c0_117] : memref<128x384xbf16, #tpu.memory_space<vmem>>, vector<128x384xbf16>
    %cst = arith.constant dense<0.000000e+00> : vector<16x384xf32>
    %149 = tpu.matmul %145, %148, %cst {dimension_numbers = #tpu.dot_dimension_numbers<[1], [0], [0], [1], [0, 0, 1, 1], [], []>} : vector<16x128xbf16>, vector<128x384xbf16>, vector<16x384xf32> -> vector<16x384xf32>
    %c0_118 = arith.constant 0 : index
    %c0_119 = arith.constant 0 : index
    %150 = vector.load %arg4[%c0_118, %c0_119] : memref<1x384xf32, #tpu.memory_space<vmem>>, vector<1x384xf32>
    %151 = vector.broadcast %150 : vector<1x384xf32> to vector<16x384xf32>
    %152 = arith.addf %149, %151 : vector<16x384xf32>
    %c0_120 = arith.constant 0 : index
    %c0_121 = arith.constant 0 : index
    %153 = vector.load %arg3[%c0_120, %c0_121] : memref<128x384xbf16, #tpu.memory_space<vmem>>, vector<128x384xbf16>
    %cst_122 = arith.constant dense<0.000000e+00> : vector<16x384xf32>
    %154 = tpu.matmul %147, %153, %cst_122 {dimension_numbers = #tpu.dot_dimension_numbers<[1], [0], [0], [1], [0, 0, 1, 1], [], []>} : vector<16x128xbf16>, vector<128x384xbf16>, vector<16x384xf32> -> vector<16x384xf32>
    %c0_123 = arith.constant 0 : index
    %c0_124 = arith.constant 0 : index
    %155 = vector.load %arg5[%c0_123, %c0_124] : memref<1x384xf32, #tpu.memory_space<vmem>>, vector<1x384xf32>
    %156 = vector.broadcast %155 : vector<1x384xf32> to vector<16x384xf32>
    %157 = arith.addf %154, %156 : vector<16x384xf32>
    %158 = vector.extract_strided_slice %152 {offsets = [0, 0], sizes = [16, 128], strides = [1, 1]} : vector<16x384xf32> to vector<16x128xf32>
    %159 = vector.extract_strided_slice %157 {offsets = [0, 0], sizes = [16, 128], strides = [1, 1]} : vector<16x384xf32> to vector<16x128xf32>
    %160 = arith.addf %158, %159 : vector<16x128xf32>
    %161 = arith.negf %160 : vector<16x128xf32>
    %162 = math.exp %161 : vector<16x128xf32>
    %cst_125 = arith.constant 1.000000e+00 : f32
    %163 = vector.broadcast %cst_125 : f32 to vector<16x128xf32>
    %164 = arith.addf %163, %162 : vector<16x128xf32>
    %165 = arith.divf %163, %164 : vector<16x128xf32>
    %166 = vector.extract_strided_slice %152 {offsets = [0, 128], sizes = [16, 128], strides = [1, 1]} : vector<16x384xf32> to vector<16x128xf32>
    %167 = vector.extract_strided_slice %157 {offsets = [0, 128], sizes = [16, 128], strides = [1, 1]} : vector<16x384xf32> to vector<16x128xf32>
    %168 = arith.addf %166, %167 : vector<16x128xf32>
    %169 = arith.negf %168 : vector<16x128xf32>
    %170 = math.exp %169 : vector<16x128xf32>
    %cst_126 = arith.constant 1.000000e+00 : f32
    %171 = vector.broadcast %cst_126 : f32 to vector<16x128xf32>
    %172 = arith.addf %171, %170 : vector<16x128xf32>
    %173 = arith.divf %171, %172 : vector<16x128xf32>
    %174 = vector.extract_strided_slice %152 {offsets = [0, 256], sizes = [16, 128], strides = [1, 1]} : vector<16x384xf32> to vector<16x128xf32>
    %175 = vector.extract_strided_slice %157 {offsets = [0, 256], sizes = [16, 128], strides = [1, 1]} : vector<16x384xf32> to vector<16x128xf32>
    %176 = arith.mulf %165, %175 : vector<16x128xf32>
    %177 = arith.addf %174, %176 : vector<16x128xf32>
    %178 = math.tanh %177 : vector<16x128xf32>
    %cst_127 = arith.constant 1.000000e+00 : f32
    %179 = vector.broadcast %cst_127 : f32 to vector<16x128xf32>
    %180 = arith.subf %179, %173 : vector<16x128xf32>
    %181 = arith.mulf %180, %178 : vector<16x128xf32>
    %182 = arith.mulf %173, %146 : vector<16x128xf32>
    %183 = arith.addf %181, %182 : vector<16x128xf32>
    %c0_128 = arith.constant 0 : index
    %c0_129 = arith.constant 0 : index
    %184 = vector.load %arg7[%c0_128, %c0_129] : memref<16x128xf32, #tpu.memory_space<vmem>>, vector<16x128xf32>
    tpu.vector_store %arg7[%c0_128, %c0_129], %183 {strides = array<i32>} : memref<16x128xf32, #tpu.memory_space<vmem>>, vector<16x128xf32>,
    %185 = arith.truncf %183 : vector<16x128xf32> to vector<16x128xbf16>
    %c0_130 = arith.constant 0 : index
    %c0_131 = arith.constant 0 : index
    %186 = vector.load %arg8[%c0_130, %c0_131] : memref<16x128xbf16, #tpu.memory_space<vmem>>, vector<16x128xbf16>
    tpu.vector_store %arg8[%c0_130, %c0_131], %185 {strides = array<i32>} : memref<16x128xbf16, #tpu.memory_space<vmem>>, vector<16x128xbf16>,
    return
  }
}

</mosaic_0001>

<llo_original>
// kernel: tpu_custom_call.1
$region0: #{tpu_custom_call.1}
  #allocation0 [shape = 'u32[]', space=smem, size = 0x4, offset = 0x4, fixed_abs, tag = 'smem constant byte address 0x4 - core index']
  #allocation1 [shape = 'u32[144,128]{1,0:T(1,128)}', space=vmem, size = 0x12000, scoped, tag = 'internal scratch']
  #allocation2 [shape = 'f32[16,128]{1,0:T(8,128)}', space=vmem, size = 0x2000, scoped, tag = 'scratch operand']
  #allocation3 [shape = 's32[16]{0}', space=sflag, size = 0x40, scoped, tag = 'scratch operand']
  #allocation15 [shape = 's32[]', space=sflag, size = 0x4, offset = 0, fixed_abs, tag = 'sflag constant byte address 0x0 - dummy sync flag']
  #allocation16 [shape = 's32[]', space=sflag, size = 0x4, offset = 0, fixed_abs, tag = 'sflag constant byte address 0x0 - dummy sync flag']
  #allocation17 [shape = 'u32[]', space=smem, size = 0x4, offset = 0x44, fixed_abs, tag = 'smem constant byte address 0x44 - assertion arg 0']
  #allocation18 [shape = 'u32[]', space=smem, size = 0x4, offset = 0x48, fixed_abs, tag = 'smem constant byte address 0x48 - assertion arg 1']
  #allocation19 [shape = 's32[]', space=sflag, size = 0x4, offset = 0, fixed_abs, tag = 'sflag constant byte address 0x0 - dummy sync flag']
  #allocation20 [shape = 's32[]', space=sflag, size = 0x4, offset = 0, fixed_abs, tag = 'sflag constant byte address 0x0 - dummy sync flag']
  #allocation21 [shape = 's32[]', space=sflag, size = 0x4, offset = 0, fixed_abs, tag = 'sflag constant byte address 0x0 - dummy sync flag']
  #allocation22 [shape = 's32[]', space=sflag, size = 0x4, offset = 0, fixed_abs, tag = 'sflag constant byte address 0x0 - dummy sync flag']
  #allocation23 [shape = 's32[]', space=sflag, size = 0x4, offset = 0, fixed_abs, tag = 'sflag constant byte address 0x0 - dummy sync flag']
  #allocation24 [shape = 's32[]', space=sflag, size = 0x4, offset = 0, fixed_abs, tag = 'sflag constant byte address 0x0 - dummy sync flag']
  #allocation25 [shape = 's32[]', space=sflag, size = 0x4, offset = 0, fixed_abs, tag = 'sflag constant byte address 0x0 - dummy sync flag']
  #allocation26 [shape = 's32[]', space=sflag, size = 0x4, offset = 0, fixed_abs, tag = 'sflag constant byte address 0x0 - dummy sync flag']
  #allocation27 [shape = 's32[]', space=sflag, size = 0x4, offset = 0, fixed_abs, tag = 'sflag constant byte address 0x0 - dummy sync flag']
  #allocation28 [shape = 's32[]', space=sflag, size = 0x4, offset = 0, fixed_abs, tag = 'sflag constant byte address 0x0 - dummy sync flag']
  #allocation29 [shape = 's32[]', space=sflag, size = 0x4, offset = 0, fixed_abs, tag = 'sflag constant byte address 0x0 - dummy sync flag']
  #allocation30 [shape = 's32[]', space=sflag, size = 0x4, offset = 0, fixed_abs, tag = 'sflag constant byte address 0x0 - dummy sync flag']
  #allocation31 [shape = 's32[]', space=sflag, size = 0x4, offset = 0, fixed_abs, tag = 'sflag constant byte address 0x0 - dummy sync flag']
  #allocation32 [shape = 's32[]', space=sflag, size = 0x4, offset = 0, fixed_abs, tag = 'sflag constant byte address 0x0 - dummy sync flag']
  #allocation33 [shape = 's32[]', space=sflag, size = 0x4, offset = 0, fixed_abs, tag = 'sflag constant byte address 0x0 - dummy sync flag']
  #allocation34 [shape = 's32[]', space=sflag, size = 0x4, offset = 0, fixed_abs, tag = 'sflag constant byte address 0x0 - dummy sync flag']
  #allocation35 [shape = 's32[]', space=sflag, size = 0x4, offset = 0, fixed_abs, tag = 'sflag constant byte address 0x0 - dummy sync flag']
  #allocation36 [shape = 's32[]', space=sflag, size = 0x4, offset = 0, fixed_abs, tag = 'sflag constant byte address 0x0 - dummy sync flag']
  #allocation37 [shape = 's32[]', space=sflag, size = 0x4, offset = 0, fixed_abs, tag = 'sflag constant byte address 0x0 - dummy sync flag']
  #allocation38 [shape = 's32[]', space=sflag, size = 0x4, offset = 0, fixed_abs, tag = 'sflag constant byte address 0x0 - dummy sync flag']
  #allocation39 [shape = 's32[]', space=sflag, size = 0x4, offset = 0, fixed_abs, tag = 'sflag constant byte address 0x0 - dummy sync flag']
  #allocation40 [shape = 's32[]', space=sflag, size = 0x4, offset = 0, fixed_abs, tag = 'sflag constant byte address 0x0 - dummy sync flag']
  #allocation41 [shape = 's32[]', space=sflag, size = 0x4, offset = 0, fixed_abs, tag = 'sflag constant byte address 0x0 - dummy sync flag']
  #allocation42 [shape = 's32[]', space=sflag, size = 0x4, offset = 0, fixed_abs, tag = 'sflag constant byte address 0x0 - dummy sync flag']
  #allocation43 [shape = 's32[]', space=sflag, size = 0x4, offset = 0, fixed_abs, tag = 'sflag constant byte address 0x0 - dummy sync flag']
  #allocation44 [shape = 's32[]', space=sflag, size = 0x4, offset = 0, fixed_abs, tag = 'sflag constant byte address 0x0 - dummy sync flag']
  #allocation45 [shape = 's32[]', space=sflag, size = 0x4, offset = 0, fixed_abs, tag = 'sflag constant byte address 0x0 - dummy sync flag']
  #allocation46 [shape = 's32[]', space=sflag, size = 0x4, offset = 0, fixed_abs, tag = 'sflag constant byte address 0x0 - dummy sync flag']
  #allocation47 [shape = 's32[]', space=sflag, size = 0x4, offset = 0, fixed_abs, tag = 'sflag constant byte address 0x0 - dummy sync flag']
  #allocation48 [shape = 's32[]', space=sflag, size = 0x4, offset = 0, fixed_abs, tag = 'sflag constant byte address 0x0 - dummy sync flag']
  %s0 = inlined_call_operand.hbm [shape: s32[16], index: 0, kind: input, shape index: {}]
  %s1 = inlined_call_operand.hbm [shape: f32[16,128], index: 1, kind: input, shape index: {}]
  %s2 = inlined_call_operand.hbm [shape: bf16[128,384], index: 2, kind: input, shape index: {}]
  %s3 = inlined_call_operand.hbm [shape: bf16[128,384], index: 3, kind: input, shape index: {}]
  %s4 = inlined_call_operand.vmem [shape: f32[1,384], index: 4, kind: input, shape index: {}]
  %s5 = inlined_call_operand.vmem [shape: f32[1,384], index: 5, kind: input, shape index: {}]
  %s6 = inlined_call_operand.hbm [shape: f32[64,128], index: 6, kind: input, shape index: {}]
  %s7 = inlined_call_operand.hbm [shape: f32[16,128], index: 7, kind: output, shape index: {0}]
  %s8 = inlined_call_operand.hbm [shape: bf16[16,128], index: 8, kind: output, shape index: {1}]
  %9 = xla_tuple %s7, %s8
  %s10 = sld [smem:[#allocation0]]
  $region122: #{tpu_custom_call.1} parent=0
    _
  %s12 = ssub.s32 1, %s10
  %s13 = scalar_select 0, %s12, %s10
  $region1: #{tpu_custom_call.1} parent=0
    #allocation4 [shape = 'u8[512]{0}', space=smem, size = 0x200, scoped, tag = 'input window, operand 0, single buffered']
    #allocation5 [shape = 's32[1]{0}', space=sflag, size = 0x4, scoped, tag = 'scoped memory for tpu_custom_call.1']
    #allocation6 [shape = 's32[1]{0}', space=sflag, size = 0x4, scoped, tag = 'scoped memory for tpu_custom_call.1']
    #allocation7 [shape = 's32[1]{0}', space=sflag, size = 0x4, scoped, tag = 'scoped memory for tpu_custom_call.1']
    #allocation8 [shape = 'u8[8192]{0}', space=vmem, size = 0x2000, scoped, tag = 'input window, operand 1, single buffered']
    #allocation9 [shape = 'u8[98304]{0}', space=vmem, size = 0x18000, scoped, tag = 'input window, operand 2, single buffered']
    #allocation10 [shape = 's32[1]{0}', space=sflag, size = 0x4, scoped, tag = 'scoped memory for tpu_custom_call.1']
    #allocation11 [shape = 'u8[98304]{0}', space=vmem, size = 0x18000, scoped, tag = 'input window, operand 3, single buffered']
    #allocation12 [shape = 'u8[8192]{0}', space=vmem, size = 0x2000, scoped, tag = 'output window, operand 0, single buffered']
    #allocation13 [shape = 'u8[4096]{0}', space=vmem, size = 0x1000, scoped, tag = 'output window, operand 1, single buffered']
    #allocation14 [shape = 's32[1]{0}', space=sflag, size = 0x4, scoped, tag = 'scoped memory for tpu_custom_call.1']
    %14 = vsyncpa [#allocation7], 0
    %15 = vsyncpa [#allocation5], 0
    %16 = vsyncpa [#allocation10], 0
    %17 = vsyncpa [#allocation6], 0
    %18 = vsyncpa [#allocation14], 0
    // Predicated region
    $region2: #{tpu_custom_call.1} parent=1 // pred_check
      _
    $region3: #{tpu_custom_call.1} parent=1 // pred_check_branch
      %20 = sbr.rel (0) target = $region5
    $region4: #{tpu_custom_call.1} parent=1 // pred_region
      %s22 = ssub.s32 16, 16
      %23 = vsyncadd [#allocation7], %s22
      %26 = dma.hbm_to_smem %s0, 16, [#allocation4], [#allocation7]
    $region5: #{tpu_custom_call.1} parent=1 // pred_fallthru
      _
    // Predicated region
    $region6: #{tpu_custom_call.1} parent=1 // pred_check
      _
    $region7: #{tpu_custom_call.1} parent=1 // pred_check_branch
      %28 = sbr.rel (0) target = $region9
    $region8: #{tpu_custom_call.1} parent=1 // pred_region
      %s30 = ssub.s32 256, 256
      %31 = vsyncadd [#allocation5], %s30
      %s32 = sshll.u32 [#allocation8], 4
      %s33 = int_to_ptr.vmem [resolvable:$true] %s32
      %38 = dma.hbm_to_vmem [thread:$0]  %s1, 256, %s33, [#allocation5], 128, 128, 8
    $region9: #{tpu_custom_call.1} parent=1 // pred_fallthru
      _
    // Predicated region
    $region10: #{tpu_custom_call.1} parent=1 // pred_check
      _
    $region11: #{tpu_custom_call.1} parent=1 // pred_check_branch
      %40 = sbr.rel (0) target = $region13
    $region12: #{tpu_custom_call.1} parent=1 // pred_region
      %s42 = ssub.s32 3072, 3072
      %43 = vsyncadd [#allocation10], %s42
      %s44 = sshll.u32 [#allocation9], 4
      %s45 = int_to_ptr.vmem [resolvable:$true] %s44
      %50 = dma.hbm_to_vmem [thread:$0]  %s2, 3072, %s45, [#allocation10], 192, 192, 12
    $region13: #{tpu_custom_call.1} parent=1 // pred_fallthru
      _
    // Predicated region
    $region14: #{tpu_custom_call.1} parent=1 // pred_check
      _
    $region15: #{tpu_custom_call.1} parent=1 // pred_check_branch
      %52 = sbr.rel (0) target = $region17
    $region16: #{tpu_custom_call.1} parent=1 // pred_region
      %s54 = ssub.s32 3072, 3072
      %55 = vsyncadd [#allocation10], %s54
      %s56 = sshll.u32 [#allocation11], 4
      %s57 = int_to_ptr.vmem [resolvable:$true] %s56
      %62 = dma.hbm_to_vmem [thread:$0]  %s3, 3072, %s57, [#allocation10], 192, 192, 12
    $region17: #{tpu_custom_call.1} parent=1 // pred_fallthru
      _
    // Predicated region
    $region18: #{tpu_custom_call.1} parent=1 // pred_check
      _
    $region19: #{tpu_custom_call.1} parent=1 // pred_check_branch
      %64 = sbr.rel (0) target = $region21
    $region20: #{tpu_custom_call.1} parent=1 // pred_region
      _
    $region21: #{tpu_custom_call.1} parent=1 // pred_fallthru
      _
    // Predicated region
    $region22: #{tpu_custom_call.1} parent=1 // pred_check
      _
    $region23: #{tpu_custom_call.1} parent=1 // pred_check_branch
      %66 = sbr.rel (0) target = $region25
    $region24: #{tpu_custom_call.1} parent=1 // pred_region
      _
    $region25: #{tpu_custom_call.1} parent=1 // pred_fallthru
      _
    // Predicated region
    $region26: #{tpu_custom_call.1} parent=1 // pred_check
      _
    $region27: #{tpu_custom_call.1} parent=1 // pred_check_branch
      %68 = sbr.rel (0) target = $region29
    $region28: #{tpu_custom_call.1} parent=1 // pred_region
      %69 = dma.done [#allocation7], 16
    $region29: #{tpu_custom_call.1} parent=1 // pred_fallthru
      _
    // Predicated region
    $region30: #{tpu_custom_call.1} parent=1 // pred_check
      _
    $region31: #{tpu_custom_call.1} parent=1 // pred_check_branch
      %71 = sbr.rel (0) target = $region33
    $region32: #{tpu_custom_call.1} parent=1 // pred_region
      %72 = dma.done [#allocation5], 256
    $region33: #{tpu_custom_call.1} parent=1 // pred_fallthru
      _
    // Predicated region
    $region34: #{tpu_custom_call.1} parent=1 // pred_check
      _
    $region35: #{tpu_custom_call.1} parent=1 // pred_check_branch
      %74 = sbr.rel (0) target = $region37
    $region36: #{tpu_custom_call.1} parent=1 // pred_region
      %75 = dma.done [#allocation10], 3072
    $region37: #{tpu_custom_call.1} parent=1 // pred_fallthru
      _
    // Predicated region
    $region38: #{tpu_custom_call.1} parent=1 // pred_check
      _
    $region39: #{tpu_custom_call.1} parent=1 // pred_check_branch
      %77 = sbr.rel (0) target = $region41
    $region40: #{tpu_custom_call.1} parent=1 // pred_region
      %78 = dma.done [#allocation10], 3072
    $region41: #{tpu_custom_call.1} parent=1 // pred_fallthru
      _
    %79 = sfence
    %s81 = sld [smem:[#allocation4]]
    %s82 = smul.addr %s81, 16
    %s83 = scalar_lea.hbm %s6, %s82
    // Predicated region
    $region42: #{tpu_custom_call.1} parent=1 // pred_check
      _
    $region43: #{tpu_custom_call.1} parent=1 // pred_check_branch
      %85 = sbr.rel target = $region45
    $region44: #{tpu_custom_call.1} parent=1 // pred_region
      %86 = sst [smem:[#allocation17]] [#allocation16]
      %87 = sst [smem:[#allocation18]] [#allocation15]
    $region45: #{tpu_custom_call.1} parent=1 // pred_fallthru
      _
    %89 = shalt.err (0)
    %s91 = sshll.u32 [#allocation2], 4
    %s92 = int_to_ptr.vmem [resolvable:$true] %s91
    %94 = dma.hbm_to_vmem [thread:$0]  %s83, 16, %s92, [#allocation3]
    %s95 = sld [smem:[#allocation4 + $0x1]]
    %s96 = smul.addr %s95, 16
    %s97 = scalar_lea.hbm %s6, %s96
    %s98 = scalar_lea.vmem [#allocation2], 1
    %s99 = scalar_lea.sflag [#allocation3], 1
    // Predicated region
    $region46: #{tpu_custom_call.1} parent=1 // pred_check
      _
    $region47: #{tpu_custom_call.1} parent=1 // pred_check_branch
      %101 = sbr.rel target = $region49
    $region48: #{tpu_custom_call.1} parent=1 // pred_region
      %102 = sst [smem:[#allocation17]] [#allocation20]
      %103 = sst [smem:[#allocation18]] [#allocation19]
    $region49: #{tpu_custom_call.1} parent=1 // pred_fallthru
      _
    %105 = shalt.err (0)
    %s107 = sshll.u32 %s98, 4
    %s108 = int_to_ptr.vmem [resolvable:$true] %s107
    %110 = dma.hbm_to_vmem [thread:$0]  %s97, 16, %s108, %s99
    %s111 = sld [smem:[#allocation4 + $0x2]]
    %s112 = smul.addr %s111, 16
    %s113 = scalar_lea.hbm %s6, %s112
    %s114 = scalar_lea.vmem [#allocation2], 2
    %s115 = scalar_lea.sflag [#allocation3], 2
    // Predicated region
    $region50: #{tpu_custom_call.1} parent=1 // pred_check
      _
    $region51: #{tpu_custom_call.1} parent=1 // pred_check_branch
      %117 = sbr.rel target = $region53
    $region52: #{tpu_custom_call.1} parent=1 // pred_region
      %118 = sst [smem:[#allocation17]] [#allocation22]
      %119 = sst [smem:[#allocation18]] [#allocation21]
    $region53: #{tpu_custom_call.1} parent=1 // pred_fallthru
      _
    %121 = shalt.err (0)
    %s123 = sshll.u32 %s114, 4
    %s124 = int_to_ptr.vmem [resolvable:$true] %s123
    %126 = dma.hbm_to_vmem [thread:$0]  %s113, 16, %s124, %s115
    %s127 = sld [smem:[#allocation4 + $0x3]]
    %s128 = smul.addr %s127, 16
    %s129 = scalar_lea.hbm %s6, %s128
    %s130 = scalar_lea.vmem [#allocation2], 3
    %s131 = scalar_lea.sflag [#allocation3], 3
    // Predicated region
    $region54: #{tpu_custom_call.1} parent=1 // pred_check
      _
    $region55: #{tpu_custom_call.1} parent=1 // pred_check_branch
      %133 = sbr.rel target = $region57
    $region56: #{tpu_custom_call.1} parent=1 // pred_region
      %134 = sst [smem:[#allocation17]] [#allocation24]
      %135 = sst [smem:[#allocation18]] [#allocation23]
    $region57: #{tpu_custom_call.1} parent=1 // pred_fallthru
      _
    %137 = shalt.err (0)
    %s139 = sshll.u32 %s130, 4
    %s140 = int_to_ptr.vmem [resolvable:$true] %s139
    %142 = dma.hbm_to_vmem [thread:$0]  %s129, 16, %s140, %s131
    %s143 = sld [smem:[#allocation4 + $0x4]]
    %s144 = smul.addr %s143, 16
    %s145 = scalar_lea.hbm %s6, %s144
    %s146 = scalar_lea.vmem [#allocation2], 4
    %s147 = scalar_lea.sflag [#allocation3], 4
    // Predicated region
    $region58: #{tpu_custom_call.1} parent=1 // pred_check
      _
    $region59: #{tpu_custom_call.1} parent=1 // pred_check_branch
      %149 = sbr.rel target = $region61
    $region60: #{tpu_custom_call.1} parent=1 // pred_region
      %150 = sst [smem:[#allocation17]] [#allocation26]
      %151 = sst [smem:[#allocation18]] [#allocation25]
    $region61: #{tpu_custom_call.1} parent=1 // pred_fallthru
      _
    %153 = shalt.err (0)
    %s155 = sshll.u32 %s146, 4
    %s156 = int_to_ptr.vmem [resolvable:$true] %s155
    %158 = dma.hbm_to_vmem [thread:$0]  %s145, 16, %s156, %s147
    %s159 = sld [smem:[#allocation4 + $0x5]]
    %s160 = smul.addr %s159, 16
    %s161 = scalar_lea.hbm %s6, %s160
    %s162 = scalar_lea.vmem [#allocation2], 5
    %s163 = scalar_lea.sflag [#allocation3], 5
    // Predicated region
    $region62: #{tpu_custom_call.1} parent=1 // pred_check
      _
    $region63: #{tpu_custom_call.1} parent=1 // pred_check_branch
      %165 = sbr.rel target = $region65
    $region64: #{tpu_custom_call.1} parent=1 // pred_region
      %166 = sst [smem:[#allocation17]] [#allocation28]
      %167 = sst [smem:[#allocation18]] [#allocation27]
    $region65: #{tpu_custom_call.1} parent=1 // pred_fallthru
      _
    %169 = shalt.err (0)
    %s171 = sshll.u32 %s162, 4
    %s172 = int_to_ptr.vmem [resolvable:$true] %s171
    %174 = dma.hbm_to_vmem [thread:$0]  %s161, 16, %s172, %s163
    %s175 = sld [smem:[#allocation4 + $0x6]]
    %s176 = smul.addr %s175, 16
    %s177 = scalar_lea.hbm %s6, %s176
    %s178 = scalar_lea.vmem [#allocation2], 6
    %s179 = scalar_lea.sflag [#allocation3], 6
    // Predicated region
    $region66: #{tpu_custom_call.1} parent=1 // pred_check
      _
    $region67: #{tpu_custom_call.1} parent=1 // pred_check_branch
      %181 = sbr.rel target = $region69
    $region68: #{tpu_custom_call.1} parent=1 // pred_region
      %182 = sst [smem:[#allocation17]] [#allocation30]
      %183 = sst [smem:[#allocation18]] [#allocation29]
    $region69: #{tpu_custom_call.1} parent=1 // pred_fallthru
      _
    %185 = shalt.err (0)
    %s187 = sshll.u32 %s178, 4
    %s188 = int_to_ptr.vmem [resolvable:$true] %s187
    %190 = dma.hbm_to_vmem [thread:$0]  %s177, 16, %s188, %s179
    %s191 = sld [smem:[#allocation4 + $0x7]]
    %s192 = smul.addr %s191, 16
    %s193 = scalar_lea.hbm %s6, %s192
    %s194 = scalar_lea.vmem [#allocation2], 7
    %s195 = scalar_lea.sflag [#allocation3], 7
    // Predicated region
    $region70: #{tpu_custom_call.1} parent=1 // pred_check
      _
    $region71: #{tpu_custom_call.1} parent=1 // pred_check_branch
      %197 = sbr.rel target = $region73
    $region72: #{tpu_custom_call.1} parent=1 // pred_region
      %198 = sst [smem:[#allocation17]] [#allocation32]
      %199 = sst [smem:[#allocation18]] [#allocation31]
    $region73: #{tpu_custom_call.1} parent=1 // pred_fallthru
      _
    %201 = shalt.err (0)
    %s203 = sshll.u32 %s194, 4
    %s204 = int_to_ptr.vmem [resolvable:$true] %s203
    %206 = dma.hbm_to_vmem [thread:$0]  %s193, 16, %s204, %s195
    %s207 = sld [smem:[#allocation4 + $0x8]]
    %s208 = smul.addr %s207, 16
    %s209 = scalar_lea.hbm %s6, %s208
    %s210 = scalar_lea.vmem [#allocation2], 8
    %s211 = scalar_lea.sflag [#allocation3], 8
    // Predicated region
    $region74: #{tpu_custom_call.1} parent=1 // pred_check
      _
    $region75: #{tpu_custom_call.1} parent=1 // pred_check_branch
      %213 = sbr.rel target = $region77
    $region76: #{tpu_custom_call.1} parent=1 // pred_region
      %214 = sst [smem:[#allocation17]] [#allocation34]
      %215 = sst [smem:[#allocation18]] [#allocation33]
    $region77: #{tpu_custom_call.1} parent=1 // pred_fallthru
      _
    %217 = shalt.err (0)
    %s219 = sshll.u32 %s210, 4
    %s220 = int_to_ptr.vmem [resolvable:$true] %s219
    %222 = dma.hbm_to_vmem [thread:$0]  %s209, 16, %s220, %s211
    %s223 = sld [smem:[#allocation4 + $0x9]]
    %s224 = smul.addr %s223, 16
    %s225 = scalar_lea.hbm %s6, %s224
    %s226 = scalar_lea.vmem [#allocation2], 9
    %s227 = scalar_lea.sflag [#allocation3], 9
    // Predicated region
    $region78: #{tpu_custom_call.1} parent=1 // pred_check
      _
    $region79: #{tpu_custom_call.1} parent=1 // pred_check_branch
      %229 = sbr.rel target = $region81
    $region80: #{tpu_custom_call.1} parent=1 // pred_region
      %230 = sst [smem:[#allocation17]] [#allocation36]
      %231 = sst [smem:[#allocation18]] [#allocation35]
    $region81: #{tpu_custom_call.1} parent=1 // pred_fallthru
      _
    %233 = shalt.err (0)
    %s235 = sshll.u32 %s226, 4
    %s236 = int_to_ptr.vmem [resolvable:$true] %s235
    %238 = dma.hbm_to_vmem [thread:$0]  %s225, 16, %s236, %s227
    %s239 = sld [smem:[#allocation4 + $0xa]]
    %s240 = smul.addr %s239, 16
    %s241 = scalar_lea.hbm %s6, %s240
    %s242 = scalar_lea.vmem [#allocation2], 10
    %s243 = scalar_lea.sflag [#allocation3], 10
    // Predicated region
    $region82: #{tpu_custom_call.1} parent=1 // pred_check
      _
    $region83: #{tpu_custom_call.1} parent=1 // pred_check_branch
      %245 = sbr.rel target = $region85
    $region84: #{tpu_custom_call.1} parent=1 // pred_region
      %246 = sst [smem:[#allocation17]] [#allocation38]
      %247 = sst [smem:[#allocation18]] [#allocation37]
    $region85: #{tpu_custom_call.1} parent=1 // pred_fallthru
      _
    %249 = shalt.err (0)
    %s251 = sshll.u32 %s242, 4
    %s252 = int_to_ptr.vmem [resolvable:$true] %s251
    %254 = dma.hbm_to_vmem [thread:$0]  %s241, 16, %s252, %s243
    %s255 = sld [smem:[#allocation4 + $0xb]]
    %s256 = smul.addr %s255, 16
    %s257 = scalar_lea.hbm %s6, %s256
    %s258 = scalar_lea.vmem [#allocation2], 11
    %s259 = scalar_lea.sflag [#allocation3], 11
    // Predicated region
    $region86: #{tpu_custom_call.1} parent=1 // pred_check
      _
    $region87: #{tpu_custom_call.1} parent=1 // pred_check_branch
      %261 = sbr.rel target = $region89
    $region88: #{tpu_custom_call.1} parent=1 // pred_region
      %262 = sst [smem:[#allocation17]] [#allocation40]
      %263 = sst [smem:[#allocation18]] [#allocation39]
    $region89: #{tpu_custom_call.1} parent=1 // pred_fallthru
      _
    %265 = shalt.err (0)
    %s267 = sshll.u32 %s258, 4
    %s268 = int_to_ptr.vmem [resolvable:$true] %s267
    %270 = dma.hbm_to_vmem [thread:$0]  %s257, 16, %s268, %s259
    %s271 = sld [smem:[#allocation4 + $0xc]]
    %s272 = smul.addr %s271, 16
    %s273 = scalar_lea.hbm %s6, %s272
    %s274 = scalar_lea.vmem [#allocation2], 12
    %s275 = scalar_lea.sflag [#allocation3], 12
    // Predicated region
    $region90: #{tpu_custom_call.1} parent=1 // pred_check
      _
    $region91: #{tpu_custom_call.1} parent=1 // pred_check_branch
      %277 = sbr.rel target = $region93
    $region92: #{tpu_custom_call.1} parent=1 // pred_region
      %278 = sst [smem:[#allocation17]] [#allocation42]
      %279 = sst [smem:[#allocation18]] [#allocation41]
    $region93: #{tpu_custom_call.1} parent=1 // pred_fallthru
      _
    %281 = shalt.err (0)
    %s283 = sshll.u32 %s274, 4
    %s284 = int_to_ptr.vmem [resolvable:$true] %s283
    %286 = dma.hbm_to_vmem [thread:$0]  %s273, 16, %s284, %s275
    %s287 = sld [smem:[#allocation4 + $0xd]]
    %s288 = smul.addr %s287, 16
    %s289 = scalar_lea.hbm %s6, %s288
    %s290 = scalar_lea.vmem [#allocation2], 13
    %s291 = scalar_lea.sflag [#allocation3], 13
    // Predicated region
    $region94: #{tpu_custom_call.1} parent=1 // pred_check
      _
    $region95: #{tpu_custom_call.1} parent=1 // pred_check_branch
      %293 = sbr.rel target = $region97
    $region96: #{tpu_custom_call.1} parent=1 // pred_region
      %294 = sst [smem:[#allocation17]] [#allocation44]
      %295 = sst [smem:[#allocation18]] [#allocation43]
    $region97: #{tpu_custom_call.1} parent=1 // pred_fallthru
      _
    %297 = shalt.err (0)
    %s299 = sshll.u32 %s290, 4
    %s300 = int_to_ptr.vmem [resolvable:$true] %s299
    %302 = dma.hbm_to_vmem [thread:$0]  %s289, 16, %s300, %s291
    %s303 = sld [smem:[#allocation4 + $0xe]]
    %s304 = smul.addr %s303, 16
    %s305 = scalar_lea.hbm %s6, %s304
    %s306 = scalar_lea.vmem [#allocation2], 14
    %s307 = scalar_lea.sflag [#allocation3], 14
    // Predicated region
    $region98: #{tpu_custom_call.1} parent=1 // pred_check
      _
    $region99: #{tpu_custom_call.1} parent=1 // pred_check_branch
      %309 = sbr.rel target = $region101
    $region100: #{tpu_custom_call.1} parent=1 // pred_region
      %310 = sst [smem:[#allocation17]] [#allocation46]
      %311 = sst [smem:[#allocation18]] [#allocation45]
    $region101: #{tpu_custom_call.1} parent=1 // pred_fallthru
      _
    %313 = shalt.err (0)
    %s315 = sshll.u32 %s306, 4
    %s316 = int_to_ptr.vmem [resolvable:$true] %s315
    %318 = dma.hbm_to_vmem [thread:$0]  %s305, 16, %s316, %s307
    %s319 = sld [smem:[#allocation4 + $0xf]]
    %s320 = smul.addr %s319, 16
    %s321 = scalar_lea.hbm %s6, %s320
    %s322 = scalar_lea.vmem [#allocation2], 15
    %s323 = scalar_lea.sflag [#allocation3], 15
    // Predicated region
    $region102: #{tpu_custom_call.1} parent=1 // pred_check
      _
    $region103: #{tpu_custom_call.1} parent=1 // pred_check_branch
      %325 = sbr.rel target = $region105
    $region104: #{tpu_custom_call.1} parent=1 // pred_region
      %326 = sst [smem:[#allocation17]] [#allocation48]
      %327 = sst [smem:[#allocation18]] [#allocation47]
    $region105: #{tpu_custom_call.1} parent=1 // pred_fallthru
      _
    %329 = shalt.err (0)
    %s331 = sshll.u32 %s322, 4
    %s332 = int_to_ptr.vmem [resolvable:$true] %s331
    %334 = dma.hbm_to_vmem [thread:$0]  %s321, 16, %s332, %s323
    %s335 = smul.u32 1, 1
    %s336 = sshll.u32 %s335, 4
    %337 = dma.done [#allocation3], %s336
    %s338 = sshll.u32 %s335, 4
    %339 = dma.done %s99, %s338
    %s340 = sshll.u32 %s335, 4
    %341 = dma.done %s115, %s340
    %s342 = sshll.u32 %s335, 4
    %343 = dma.done %s131, %s342
    %s344 = sshll.u32 %s335, 4
    %345 = dma.done %s147, %s344
    %s346 = sshll.u32 %s335, 4
    %347 = dma.done %s163, %s346
    %s348 = sshll.u32 %s335, 4
    %349 = dma.done %s179, %s348
    %s350 = sshll.u32 %s335, 4
    %351 = dma.done %s195, %s350
    %s352 = sshll.u32 %s335, 4
    %353 = dma.done %s211, %s352
    %s354 = sshll.u32 %s335, 4
    %355 = dma.done %s227, %s354
    %s356 = sshll.u32 %s335, 4
    %357 = dma.done %s243, %s356
    %s358 = sshll.u32 %s335, 4
    %359 = dma.done %s259, %s358
    %s360 = sshll.u32 %s335, 4
    %361 = dma.done %s275, %s360
    %s362 = sshll.u32 %s335, 4
    %363 = dma.done %s291, %s362
    %s364 = sshll.u32 %s335, 4
    %365 = dma.done %s307, %s364
    %s366 = sshll.u32 %s335, 4
    %367 = dma.done %s323, %s366
    %v368 = vld [vmem:[#allocation2] sm:$0xff]
    %v369 = vld [vmem:[#allocation2 + $0x8] sm:$0xff]
    %v370 = vpack.c.bf16 %v369, %v368
    %v371 = vld [vmem:[#allocation8] sm:$0xff]
    %v372 = vld [vmem:[#allocation8 + $0x8] sm:$0xff]
    %v373 = vpack.c.bf16 %v372, %v371
    %v374 = vld [vmem:[#allocation9] sm:$0xff]
    %v375 = vld [vmem:[#allocation9 + $0x8] sm:$0xf]
    %v376 = vld [vmem:[#allocation9 + $0xc] sm:$0xff]
    %v377 = vld [vmem:[#allocation9 + $0x14] sm:$0xf]
    %v378 = vld [vmem:[#allocation9 + $0x18] sm:$0xff]
    %v379 = vld [vmem:[#allocation9 + $0x20] sm:$0xf]
    %v380 = vld [vmem:[#allocation9 + $0x24] sm:$0xff]
    %v381 = vld [vmem:[#allocation9 + $0x2c] sm:$0xf]
    %v382 = vld [vmem:[#allocation9 + $0x30] sm:$0xff]
    %v383 = vld [vmem:[#allocation9 + $0x38] sm:$0xf]
    %v384 = vld [vmem:[#allocation9 + $0x3c] sm:$0xff]
    %v385 = vld [vmem:[#allocation9 + $0x44] sm:$0xf]
    %v386 = vld [vmem:[#allocation9 + $0x48] sm:$0xff]
    %v387 = vld [vmem:[#allocation9 + $0x50] sm:$0xf]
    %v388 = vld [vmem:[#allocation9 + $0x54] sm:$0xff]
    %v389 = vld [vmem:[#allocation9 + $0x5c] sm:$0xf]
    %v390 = vld [vmem:[#allocation9 + $0x60] sm:$0xff]
    %v391 = vld [vmem:[#allocation9 + $0x68] sm:$0xf]
    %v392 = vld [vmem:[#allocation9 + $0x6c] sm:$0xff]
    %v393 = vld [vmem:[#allocation9 + $0x74] sm:$0xf]
    %v394 = vld [vmem:[#allocation9 + $0x78] sm:$0xff]
    %v395 = vld [vmem:[#allocation9 + $0x80] sm:$0xf]
    %v396 = vld [vmem:[#allocation9 + $0x84] sm:$0xff]
    %v397 = vld [vmem:[#allocation9 + $0x8c] sm:$0xf]
    %v398 = vld [vmem:[#allocation9 + $0x90] sm:$0xff]
    %v399 = vld [vmem:[#allocation9 + $0x98] sm:$0xf]
    %v400 = vld [vmem:[#allocation9 + $0x9c] sm:$0xff]
    %v401 = vld [vmem:[#allocation9 + $0xa4] sm:$0xf]
    %v402 = vld [vmem:[#allocation9 + $0xa8] sm:$0xff]
    %v403 = vld [vmem:[#allocation9 + $0xb0] sm:$0xf]
    %v404 = vld [vmem:[#allocation9 + $0xb4] sm:$0xff]
    %v405 = vld [vmem:[#allocation9 + $0xbc] sm:$0xf]
    %v406 = vld [vmem:[%s4] sm:$0x7]
    %v408 = vlaneseq
    %v409 = vshrl.u32 %v408, 7
    %v410 = vsub.s32 0, %v409
    %v411 = vrot.slane %v406, %v410
    %v412 = vlaneseq
    %v413 = vshrl.u32 %v412, 7
    %v414 = vsub.s32 1, %v413
    %v415 = vrot.slane %v406, %v414
    %v416 = vlaneseq
    %v417 = vshrl.u32 %v416, 7
    %v418 = vsub.s32 2, %v417
    %v419 = vrot.slane %v406, %v418
    %v455 = vunpack.c.l.b16 %v374
    %v456 = vunpack.c.h.b16 %v374
    %v457 = vunpack.c.l.b16 %v375
    %v458 = vunpack.c.l.b16 %v376
    %v459 = vunpack.c.h.b16 %v376
    %v460 = vunpack.c.l.b16 %v377
    %v461 = vunpack.c.l.b16 %v378
    %v462 = vunpack.c.h.b16 %v378
    %v463 = vunpack.c.l.b16 %v379
    %v464 = vunpack.c.l.b16 %v380
    %v465 = vunpack.c.h.b16 %v380
    %v466 = vunpack.c.l.b16 %v381
    %v467 = vunpack.c.l.b16 %v382
    %v468 = vunpack.c.h.b16 %v382
    %v469 = vunpack.c.l.b16 %v383
    %v470 = vunpack.c.l.b16 %v384
    %v471 = vunpack.c.h.b16 %v384
    %v472 = vunpack.c.l.b16 %v385
    %v473 = vunpack.c.l.b16 %v386
    %v474 = vunpack.c.h.b16 %v386
    %v475 = vunpack.c.l.b16 %v387
    %v476 = vunpack.c.l.b16 %v388
    %v477 = vunpack.c.h.b16 %v388
    %v478 = vunpack.c.l.b16 %v389
    %v479 = vunpack.c.l.b16 %v390
    %v480 = vunpack.c.h.b16 %v390
    %v481 = vunpack.c.l.b16 %v391
    %v482 = vunpack.c.l.b16 %v392
    %v483 = vunpack.c.h.b16 %v392
    %v484 = vunpack.c.l.b16 %v393
    %v485 = vunpack.c.l.b16 %v394
    %v486 = vunpack.c.h.b16 %v394
    %v487 = vunpack.c.l.b16 %v395
    %v488 = vunpack.c.l.b16 %v396
    %v489 = vunpack.c.h.b16 %v396
    %v490 = vunpack.c.l.b16 %v397
    %v491 = vunpack.c.l.b16 %v398
    %v492 = vunpack.c.h.b16 %v398
    %v493 = vunpack.c.l.b16 %v399
    %v494 = vunpack.c.l.b16 %v400
    %v495 = vunpack.c.h.b16 %v400
    %v496 = vunpack.c.l.b16 %v401
    %v497 = vunpack.c.l.b16 %v402
    %v498 = vunpack.c.h.b16 %v402
    %v499 = vunpack.c.l.b16 %v403
    %v500 = vunpack.c.l.b16 %v404
    %v501 = vunpack.c.h.b16 %v404
    %v502 = vunpack.c.l.b16 %v405
    %v503 = vpack.c.b16 %v458, %v455
    %v504 = vpack.c.b16 %v459, %v456
    %v505 = vpack.c.b16 %v460, %v457
    %v506 = vpack.c.b16 %v464, %v461
    %v507 = vpack.c.b16 %v465, %v462
    %v508 = vpack.c.b16 %v466, %v463
    %v509 = vpack.c.b16 %v470, %v467
    %v510 = vpack.c.b16 %v471, %v468
    %v511 = vpack.c.b16 %v472, %v469
    %v512 = vpack.c.b16 %v476, %v473
    %v513 = vpack.c.b16 %v477, %v474
    %v514 = vpack.c.b16 %v478, %v475
    %v515 = vpack.c.b16 %v482, %v479
    %v516 = vpack.c.b16 %v483, %v480
    %v517 = vpack.c.b16 %v484, %v481
    %v518 = vpack.c.b16 %v488, %v485
    %v519 = vpack.c.b16 %v489, %v486
    %v520 = vpack.c.b16 %v490, %v487
    %v521 = vpack.c.b16 %v494, %v491
    %v522 = vpack.c.b16 %v495, %v492
    %v523 = vpack.c.b16 %v496, %v493
    %v524 = vpack.c.b16 %v500, %v497
    %v525 = vpack.c.b16 %v501, %v498
    %v526 = vpack.c.b16 %v502, %v499
    %551 = vmatprep.subr.bf16.mxu0 %v504
    %552 = vmatpush1.bf16.msra.mxu0 %v503
    %553 = vmatprep.subr.bf16.mxu0 %v507
    %554 = vmatpush1.bf16.msra.mxu0 %v506
    %555 = vmatprep.subr.bf16.mxu0 %v510
    %556 = vmatpush1.bf16.msra.mxu0 %v509
    %557 = vmatprep.subr.bf16.mxu0 %v513
    %558 = vmatpush1.bf16.msra.mxu0 %v512
    %559 = vmatprep.subr.bf16.mxu0 %v516
    %560 = vmatpush1.bf16.msra.mxu0 %v515
    %561 = vmatprep.subr.bf16.mxu0 %v519
    %562 = vmatpush1.bf16.msra.mxu0 %v518
    %563 = vmatprep.subr.bf16.mxu0 %v522
    %564 = vmatpush1.bf16.msra.mxu0 %v521
    %565 = vmatprep.subr.bf16.mxu0 %v525
    %566 = vmatpush1.bf16.msra.mxu0 %v524
    %567 = vmatprep.subr.bf16.mxu0 0
    %568 = vmatpush1.bf16.msra.mxu0 0
    %569 = vmatprep.subr.bf16.mxu0 0
    %570 = vmatpush1.bf16.msra.mxu0 0
    %571 = vmatprep.subr.bf16.mxu0 0
    %572 = vmatpush1.bf16.msra.mxu0 0
    %573 = vmatprep.subr.bf16.mxu0 0
    %574 = vmatpush1.bf16.msra.mxu0 0
    %575 = vmatprep.subr.bf16.mxu0 0
    %576 = vmatpush1.bf16.msra.mxu0 0
    %577 = vmatprep.subr.bf16.mxu0 0
    %578 = vmatpush1.bf16.msra.mxu0 0
    %579 = vmatprep.subr.bf16.mxu0 0
    %580 = vmatpush1.bf16.msra.mxu0 0
    %581 = vmatprep.subr.bf16.mxu0 0
    %582 = vmatpush1.bf16.msra.mxu0 0
    %583 = vmatprep.mubr.bf16.mxu0 0
    %584 = vmatmul.mubr.bf16.gmra.mrb[0].mxu0 %v370
    %v585 = vpop.f32.mrb[0].mxu0
    %v586 = vadd.f32 %v411, %v585
    %v587 = vpop.f32.mrb[0].mxu0
    %v588 = vadd.f32 %v415, %v587
    %v589 = vpop.f32.mrb[0].mxu0
    %v590 = vadd.f32 %v411, %v589
    %v591 = vpop.f32.mrb[0].mxu0
    %v592 = vadd.f32 %v415, %v591
    %593 = vdwg.mxu0
    %594 = vmatprep.subr.bf16.mxu0 0
    %595 = vmatpush1.bf16.msra.mxu0 %v505
    %596 = vmatprep.subr.bf16.mxu0 0
    %597 = vmatpush1.bf16.msra.mxu0 %v508
    %598 = vmatprep.subr.bf16.mxu0 0
    %599 = vmatpush1.bf16.msra.mxu0 %v511
    %600 = vmatprep.subr.bf16.mxu0 0
    %601 = vmatpush1.bf16.msra.mxu0 %v514
    %602 = vmatprep.subr.bf16.mxu0 0
    %603 = vmatpush1.bf16.msra.mxu0 %v517
    %604 = vmatprep.subr.bf16.mxu0 0
    %605 = vmatpush1.bf16.msra.mxu0 %v520
    %606 = vmatprep.subr.bf16.mxu0 0
    %607 = vmatpush1.bf16.msra.mxu0 %v523
    %608 = vmatprep.subr.bf16.mxu0 0
    %609 = vmatpush1.bf16.msra.mxu0 %v526
    %610 = vmatprep.subr.bf16.mxu0 0
    %611 = vmatpush1.bf16.msra.mxu0 0
    %612 = vmatprep.subr.bf16.mxu0 0
    %613 = vmatpush1.bf16.msra.mxu0 0
    %614 = vmatprep.subr.bf16.mxu0 0
    %615 = vmatpush1.bf16.msra.mxu0 0
    %616 = vmatprep.subr.bf16.mxu0 0
    %617 = vmatpush1.bf16.msra.mxu0 0
    %618 = vmatprep.subr.bf16.mxu0 0
    %619 = vmatpush1.bf16.msra.mxu0 0
    %620 = vmatprep.subr.bf16.mxu0 0
    %621 = vmatpush1.bf16.msra.mxu0 0
    %622 = vmatprep.subr.bf16.mxu0 0
    %623 = vmatpush1.bf16.msra.mxu0 0
    %624 = vmatprep.subr.bf16.mxu0 0
    %625 = vmatpush1.bf16.msra.mxu0 0
    %626 = vmatprep.mubr.bf16.mxu0 0
    %627 = vmatmul.mubr.bf16.gmra.mrb[0].mxu0 %v370
    %v628 = vpop.f32.mrb[0].mxu0
    %v629 = vadd.f32 %v419, %v628
    %v630 = vpop.f32.mrb[0].mxu0
    %v631 = vpop.f32.mrb[0].mxu0
    %v632 = vadd.f32 %v419, %v631
    %v633 = vpop.f32.mrb[0].mxu0
    %634 = vdwg.mxu0
    %v635 = vld [vmem:[#allocation11] sm:$0xff]
    %v636 = vld [vmem:[#allocation11 + $0x8] sm:$0xf]
    %v637 = vld [vmem:[#allocation11 + $0xc] sm:$0xff]
    %v638 = vld [vmem:[#allocation11 + $0x14] sm:$0xf]
    %v639 = vld [vmem:[#allocation11 + $0x18] sm:$0xff]
    %v640 = vld [vmem:[#allocation11 + $0x20] sm:$0xf]
    %v641 = vld [vmem:[#allocation11 + $0x24] sm:$0xff]
    %v642 = vld [vmem:[#allocation11 + $0x2c] sm:$0xf]
    %v643 = vld [vmem:[#allocation11 + $0x30] sm:$0xff]
    %v644 = vld [vmem:[#allocation11 + $0x38] sm:$0xf]
    %v645 = vld [vmem:[#allocation11 + $0x3c] sm:$0xff]
    %v646 = vld [vmem:[#allocation11 + $0x44] sm:$0xf]
    %v647 = vld [vmem:[#allocation11 + $0x48] sm:$0xff]
    %v648 = vld [vmem:[#allocation11 + $0x50] sm:$0xf]
    %v649 = vld [vmem:[#allocation11 + $0x54] sm:$0xff]
    %v650 = vld [vmem:[#allocation11 + $0x5c] sm:$0xf]
    %v651 = vld [vmem:[#allocation11 + $0x60] sm:$0xff]
    %v652 = vld [vmem:[#allocation11 + $0x68] sm:$0xf]
    %v653 = vld [vmem:[#allocation11 + $0x6c] sm:$0xff]
    %v654 = vld [vmem:[#allocation11 + $0x74] sm:$0xf]
    %v655 = vld [vmem:[#allocation11 + $0x78] sm:$0xff]
    %v656 = vld [vmem:[#allocation11 + $0x80] sm:$0xf]
    %v657 = vld [vmem:[#allocation11 + $0x84] sm:$0xff]
    %v658 = vld [vmem:[#allocation11 + $0x8c] sm:$0xf]
    %v659 = vld [vmem:[#allocation11 + $0x90] sm:$0xff]
    %v660 = vld [vmem:[#allocation11 + $0x98] sm:$0xf]
    %v661 = vld [vmem:[#allocation11 + $0x9c] sm:$0xff]
    %v662 = vld [vmem:[#allocation11 + $0xa4] sm:$0xf]
    %v663 = vld [vmem:[#allocation11 + $0xa8] sm:$0xff]
    %v664 = vld [vmem:[#allocation11 + $0xb0] sm:$0xf]
    %v665 = vld [vmem:[#allocation11 + $0xb4] sm:$0xff]
    %v666 = vld [vmem:[#allocation11 + $0xbc] sm:$0xf]
    %v667 = vld [vmem:[%s5] sm:$0x7]
    %v669 = vlaneseq
    %v670 = vshrl.u32 %v669, 7
    %v671 = vsub.s32 0, %v670
    %v672 = vrot.slane %v667, %v671
    %v673 = vlaneseq
    %v674 = vshrl.u32 %v673, 7
    %v675 = vsub.s32 1, %v674
    %v676 = vrot.slane %v667, %v675
    %v677 = vlaneseq
    %v678 = vshrl.u32 %v677, 7
    %v679 = vsub.s32 2, %v678
    %v680 = vrot.slane %v667, %v679
    %v716 = vunpack.c.l.b16 %v635
    %v717 = vunpack.c.h.b16 %v635
    %v718 = vunpack.c.l.b16 %v636
    %v719 = vunpack.c.l.b16 %v637
    %v720 = vunpack.c.h.b16 %v637
    %v721 = vunpack.c.l.b16 %v638
    %v722 = vunpack.c.l.b16 %v639
    %v723 = vunpack.c.h.b16 %v639
    %v724 = vunpack.c.l.b16 %v640
    %v725 = vunpack.c.l.b16 %v641
    %v726 = vunpack.c.h.b16 %v641
    %v727 = vunpack.c.l.b16 %v642
    %v728 = vunpack.c.l.b16 %v643
    %v729 = vunpack.c.h.b16 %v643
    %v730 = vunpack.c.l.b16 %v644
    %v731 = vunpack.c.l.b16 %v645
    %v732 = vunpack.c.h.b16 %v645
    %v733 = vunpack.c.l.b16 %v646
    %v734 = vunpack.c.l.b16 %v647
    %v735 = vunpack.c.h.b16 %v647
    %v736 = vunpack.c.l.b16 %v648
    %v737 = vunpack.c.l.b16 %v649
    %v738 = vunpack.c.h.b16 %v649
    %v739 = vunpack.c.l.b16 %v650
    %v740 = vunpack.c.l.b16 %v651
    %v741 = vunpack.c.h.b16 %v651
    %v742 = vunpack.c.l.b16 %v652
    %v743 = vunpack.c.l.b16 %v653
    %v744 = vunpack.c.h.b16 %v653
    %v745 = vunpack.c.l.b16 %v654
    %v746 = vunpack.c.l.b16 %v655
    %v747 = vunpack.c.h.b16 %v655
    %v748 = vunpack.c.l.b16 %v656
    %v749 = vunpack.c.l.b16 %v657
    %v750 = vunpack.c.h.b16 %v657
    %v751 = vunpack.c.l.b16 %v658
    %v752 = vunpack.c.l.b16 %v659
    %v753 = vunpack.c.h.b16 %v659
    %v754 = vunpack.c.l.b16 %v660
    %v755 = vunpack.c.l.b16 %v661
    %v756 = vunpack.c.h.b16 %v661
    %v757 = vunpack.c.l.b16 %v662
    %v758 = vunpack.c.l.b16 %v663
    %v759 = vunpack.c.h.b16 %v663
    %v760 = vunpack.c.l.b16 %v664
    %v761 = vunpack.c.l.b16 %v665
    %v762 = vunpack.c.h.b16 %v665
    %v763 = vunpack.c.l.b16 %v666
    %v764 = vpack.c.b16 %v719, %v716
    %v765 = vpack.c.b16 %v720, %v717
    %v766 = vpack.c.b16 %v721, %v718
    %v767 = vpack.c.b16 %v725, %v722
    %v768 = vpack.c.b16 %v726, %v723
    %v769 = vpack.c.b16 %v727, %v724
    %v770 = vpack.c.b16 %v731, %v728
    %v771 = vpack.c.b16 %v732, %v729
    %v772 = vpack.c.b16 %v733, %v730
    %v773 = vpack.c.b16 %v737, %v734
    %v774 = vpack.c.b16 %v738, %v735
    %v775 = vpack.c.b16 %v739, %v736
    %v776 = vpack.c.b16 %v743, %v740
    %v777 = vpack.c.b16 %v744, %v741
    %v778 = vpack.c.b16 %v745, %v742
    %v779 = vpack.c.b16 %v749, %v746
    %v780 = vpack.c.b16 %v750, %v747
    %v781 = vpack.c.b16 %v751, %v748
    %v782 = vpack.c.b16 %v755, %v752
    %v783 = vpack.c.b16 %v756, %v753
    %v784 = vpack.c.b16 %v757, %v754
    %v785 = vpack.c.b16 %v761, %v758
    %v786 = vpack.c.b16 %v762, %v759
    %v787 = vpack.c.b16 %v763, %v760
    %812 = vmatprep.subr.bf16.mxu0 %v765
    %813 = vmatpush1.bf16.msra.mxu0 %v764
    %814 = vmatprep.subr.bf16.mxu0 %v768
    %815 = vmatpush1.bf16.msra.mxu0 %v767
    %816 = vmatprep.subr.bf16.mxu0 %v771
    %817 = vmatpush1.bf16.msra.mxu0 %v770
    %818 = vmatprep.subr.bf16.mxu0 %v774
    %819 = vmatpush1.bf16.msra.mxu0 %v773
    %820 = vmatprep.subr.bf16.mxu0 %v777
    %821 = vmatpush1.bf16.msra.mxu0 %v776
    %822 = vmatprep.subr.bf16.mxu0 %v780
    %823 = vmatpush1.bf16.msra.mxu0 %v779
    %824 = vmatprep.subr.bf16.mxu0 %v783
    %825 = vmatpush1.bf16.msra.mxu0 %v782
    %826 = vmatprep.subr.bf16.mxu0 %v786
    %827 = vmatpush1.bf16.msra.mxu0 %v785
    %828 = vmatprep.subr.bf16.mxu0 0
    %829 = vmatpush1.bf16.msra.mxu0 0
    %830 = vmatprep.subr.bf16.mxu0 0
    %831 = vmatpush1.bf16.msra.mxu0 0
    %832 = vmatprep.subr.bf16.mxu0 0
    %833 = vmatpush1.bf16.msra.mxu0 0
    %834 = vmatprep.subr.bf16.mxu0 0
    %835 = vmatpush1.bf16.msra.mxu0 0
    %836 = vmatprep.subr.bf16.mxu0 0
    %837 = vmatpush1.bf16.msra.mxu0 0
    %838 = vmatprep.subr.bf16.mxu0 0
    %839 = vmatpush1.bf16.msra.mxu0 0
    %840 = vmatprep.subr.bf16.mxu0 0
    %841 = vmatpush1.bf16.msra.mxu0 0
    %842 = vmatprep.subr.bf16.mxu0 0
    %843 = vmatpush1.bf16.msra.mxu0 0
    %844 = vmatprep.mubr.bf16.mxu0 0
    %845 = vmatmul.mubr.bf16.gmra.mrb[0].mxu0 %v373
    %v846 = vpop.f32.mrb[0].mxu0
    %v847 = vadd.f32 %v672, %v846
    %v848 = vpop.f32.mrb[0].mxu0
    %v849 = vadd.f32 %v676, %v848
    %v850 = vpop.f32.mrb[0].mxu0
    %v851 = vadd.f32 %v672, %v850
    %v852 = vpop.f32.mrb[0].mxu0
    %v853 = vadd.f32 %v676, %v852
    %854 = vdwg.mxu0
    %855 = vmatprep.subr.bf16.mxu0 0
    %856 = vmatpush1.bf16.msra.mxu0 %v766
    %857 = vmatprep.subr.bf16.mxu0 0
    %858 = vmatpush1.bf16.msra.mxu0 %v769
    %859 = vmatprep.subr.bf16.mxu0 0
    %860 = vmatpush1.bf16.msra.mxu0 %v772
    %861 = vmatprep.subr.bf16.mxu0 0
    %862 = vmatpush1.bf16.msra.mxu0 %v775
    %863 = vmatprep.subr.bf16.mxu0 0
    %864 = vmatpush1.bf16.msra.mxu0 %v778
    %865 = vmatprep.subr.bf16.mxu0 0
    %866 = vmatpush1.bf16.msra.mxu0 %v781
    %867 = vmatprep.subr.bf16.mxu0 0
    %868 = vmatpush1.bf16.msra.mxu0 %v784
    %869 = vmatprep.subr.bf16.mxu0 0
    %870 = vmatpush1.bf16.msra.mxu0 %v787
    %871 = vmatprep.subr.bf16.mxu0 0
    %872 = vmatpush1.bf16.msra.mxu0 0
    %873 = vmatprep.subr.bf16.mxu0 0
    %874 = vmatpush1.bf16.msra.mxu0 0
    %875 = vmatprep.subr.bf16.mxu0 0
    %876 = vmatpush1.bf16.msra.mxu0 0
    %877 = vmatprep.subr.bf16.mxu0 0
    %878 = vmatpush1.bf16.msra.mxu0 0
    %879 = vmatprep.subr.bf16.mxu0 0
    %880 = vmatpush1.bf16.msra.mxu0 0
    %881 = vmatprep.subr.bf16.mxu0 0
    %882 = vmatpush1.bf16.msra.mxu0 0
    %883 = vmatprep.subr.bf16.mxu0 0
    %884 = vmatpush1.bf16.msra.mxu0 0
    %885 = vmatprep.subr.bf16.mxu0 0
    %886 = vmatpush1.bf16.msra.mxu0 0
    %887 = vmatprep.mubr.bf16.mxu0 0
    %888 = vmatmul.mubr.bf16.gmra.mrb[0].mxu0 %v373
    %v889 = vpop.f32.mrb[0].mxu0
    %v890 = vadd.f32 %v680, %v889
    %v891 = vpop.f32.mrb[0].mxu0
    %v892 = vpop.f32.mrb[0].mxu0
    %v893 = vadd.f32 %v680, %v892
    %v894 = vpop.f32.mrb[0].mxu0
    %895 = vdwg.mxu0
    %v896 = vadd.f32 %v586, %v847
    %v897 = vadd.f32 %v590, %v851
    %v898 = vxor.u32 %v896, 2147483648
    %v899 = vxor.u32 %v897, 2147483648
    %v900 = vmul.f32 %v898, 1.442695
    %v901 = vpow.pop %v900
    %v902 = vmul.f32 %v899, 1.442695
    %v903 = vpow.pop %v902
    %v904 = vadd.f32 %v901, 1.0
    %v905 = vadd.f32 %v903, 1.0
    %v906 = vrcp.pop %v904
    %v907 = vmul.f32 1.0, %v906
    %v908 = vrcp.pop %v905
    %v909 = vmul.f32 1.0, %v908
    %v910 = vadd.f32 %v588, %v849
    %v911 = vadd.f32 %v592, %v853
    %v912 = vxor.u32 %v910, 2147483648
    %v913 = vxor.u32 %v911, 2147483648
    %v914 = vmul.f32 %v912, 1.442695
    %v915 = vpow.pop %v914
    %v916 = vmul.f32 %v913, 1.442695
    %v917 = vpow.pop %v916
    %v918 = vadd.f32 %v915, 1.0
    %v919 = vadd.f32 %v917, 1.0
    %v920 = vrcp.pop %v918
    %v921 = vmul.f32 1.0, %v920
    %v922 = vrcp.pop %v919
    %v923 = vmul.f32 1.0, %v922
    %v924 = vmul.f32 %v907, %v890
    %v925 = vmul.f32 %v909, %v893
    %v926 = vadd.f32 %v629, %v924
    %v927 = vadd.f32 %v632, %v925
    %v928 = vtanh.pop %v926
    %v929 = vtanh.pop %v927
    %v930 = vsub.f32 1.0, %v921
    %v931 = vsub.f32 1.0, %v923
    %v932 = vmul.f32 %v930, %v928
    %v933 = vmul.f32 %v931, %v929
    %v934 = vmul.f32 %v921, %v371
    %v935 = vmul.f32 %v923, %v372
    %v936 = vadd.f32 %v932, %v934
    %v937 = vadd.f32 %v933, %v935
    %938 = vst [vmem:[#allocation12] sm:$0xff] %v936
    %939 = vst [vmem:[#allocation12 + $0x8] sm:$0xff] %v937
    %v940 = vpack.c.bf16 %v937, %v936
    %v942 = vunpack.c.l.b16 %v940
    %v943 = vunpack.c.h.b16 %v940
    %v944 = vpack.c.b16 %v942, %v942
    %v945 = vpack.c.b16 %v943, %v943
    %948 = vst [vmem:[#allocation13] sm:$0xf] %v944
    %949 = vst [vmem:[#allocation13 + $0x4] sm:$0xf] %v945
    // Predicated region
    $region106: #{tpu_custom_call.1} parent=1 // pred_check
      _
    $region107: #{tpu_custom_call.1} parent=1 // pred_check_branch
      %951 = sbr.rel (0) target = $region109
    $region108: #{tpu_custom_call.1} parent=1 // pred_region
      %s953 = ssub.s32 256, 256
      %954 = vsyncadd [#allocation6], %s953
      %s955 = sshll.u32 [#allocation12], 4
      %s956 = int_to_ptr.vmem [resolvable:$true] %s955
      %961 = dma.vmem_to_hbm [thread:$0]  %s956, 256, %s7, [#allocation6], 128, 128, 8
    $region109: #{tpu_custom_call.1} parent=1 // pred_fallthru
      _
    // Predicated region
    $region110: #{tpu_custom_call.1} parent=1 // pred_check
      _
    $region111: #{tpu_custom_call.1} parent=1 // pred_check_branch
      %963 = sbr.rel (0) target = $region113
    $region112: #{tpu_custom_call.1} parent=1 // pred_region
      %s965 = ssub.s32 128, 128
      %966 = vsyncadd [#allocation14], %s965
      %s967 = sshll.u32 [#allocation13], 4
      %s968 = int_to_ptr.vmem [resolvable:$true] %s967
      %973 = dma.vmem_to_hbm [thread:$0]  %s968, 128, %s8, [#allocation14], 64, 64, 4
    $region113: #{tpu_custom_call.1} parent=1 // pred_fallthru
      _
    // Predicated region
    $region114: #{tpu_custom_call.1} parent=1 // pred_check
      _
    $region115: #{tpu_custom_call.1} parent=1 // pred_check_branch
      %975 = sbr.rel (0) target = $region117
    $region116: #{tpu_custom_call.1} parent=1 // pred_region
      %976 = dma.done [#allocation6], 256
    $region117: #{tpu_custom_call.1} parent=1 // pred_fallthru
      _
    // Predicated region
    $region118: #{tpu_custom_call.1} parent=1 // pred_check
      _
    $region119: #{tpu_custom_call.1} parent=1 // pred_check_branch
      %978 = sbr.rel (0) target = $region121
    $region120: #{tpu_custom_call.1} parent=1 // pred_region
      %979 = dma.done [#allocation14], 128
    $region121: #{tpu_custom_call.1} parent=1 // pred_fallthru
      _
    %980 = vsyncpa [#allocation5], 1
    %981 = vsyncpa [#allocation10], 1
    %982 = vsyncpa [#allocation6], 1
    %983 = vsyncpa [#allocation14], 1
    %984 = vsyncpa [#allocation7], 1
  %985 = vsyncmov [#allocation3]
  %s986 = vpop.sfrf %985
  %p987 = scmp.eq.s32.totalorder %s986, 0
  %p988 = pneg %p987
  %990 = shalt.err (%p988)
  %s991 = scalar_lea.sflag [#allocation3], 1
  %992 = vsyncmov %s991
  %s993 = vpop.sfrf %992
  %p994 = scmp.eq.s32.totalorder %s993, 0
  %p995 = pneg %p994
  %997 = shalt.err (%p995)
  %s998 = scalar_lea.sflag [#allocation3], 2
  %999 = vsyncmov %s998
  %s1000 = vpop.sfrf %999
  %p1001 = scmp.eq.s32.totalorder %s1000, 0
  %p1002 = pneg %p1001
  %1004 = shalt.err (%p1002)
  %s1005 = scalar_lea.sflag [#allocation3], 3
  %1006 = vsyncmov %s1005
  %s1007 = vpop.sfrf %1006
  %p1008 = scmp.eq.s32.totalorder %s1007, 0
  %p1009 = pneg %p1008
  %1011 = shalt.err (%p1009)
  %s1012 = scalar_lea.sflag [#allocation3], 4
  %1013 = vsyncmov %s1012
  %s1014 = vpop.sfrf %1013
  %p1015 = scmp.eq.s32.totalorder %s1014, 0
  %p1016 = pneg %p1015
  %1018 = shalt.err (%p1016)
  %s1019 = scalar_lea.sflag [#allocation3], 5
  %1020 = vsyncmov %s1019
  %s1021 = vpop.sfrf %1020
  %p1022 = scmp.eq.s32.totalorder %s1021, 0
  %p1023 = pneg %p1022
  %1025 = shalt.err (%p1023)
  %s1026 = scalar_lea.sflag [#allocation3], 6
  %1027 = vsyncmov %s1026
  %s1028 = vpop.sfrf %1027
  %p1029 = scmp.eq.s32.totalorder %s1028, 0
  %p1030 = pneg %p1029
  %1032 = shalt.err (%p1030)
  %s1033 = scalar_lea.sflag [#allocation3], 7
  %1034 = vsyncmov %s1033
  %s1035 = vpop.sfrf %1034
  %p1036 = scmp.eq.s32.totalorder %s1035, 0
  %p1037 = pneg %p1036
  %1039 = shalt.err (%p1037)
  %s1040 = scalar_lea.sflag [#allocation3], 8
  %1041 = vsyncmov %s1040
  %s1042 = vpop.sfrf %1041
  %p1043 = scmp.eq.s32.totalorder %s1042, 0
  %p1044 = pneg %p1043
  %1046 = shalt.err (%p1044)
  %s1047 = scalar_lea.sflag [#allocation3], 9
  %1048 = vsyncmov %s1047
  %s1049 = vpop.sfrf %1048
  %p1050 = scmp.eq.s32.totalorder %s1049, 0
  %p1051 = pneg %p1050
  %1053 = shalt.err (%p1051)
  %s1054 = scalar_lea.sflag [#allocation3], 10
  %1055 = vsyncmov %s1054
  %s1056 = vpop.sfrf %1055
  %p1057 = scmp.eq.s32.totalorder %s1056, 0
  %p1058 = pneg %p1057
  %1060 = shalt.err (%p1058)
  %s1061 = scalar_lea.sflag [#allocation3], 11
  %1062 = vsyncmov %s1061
  %s1063 = vpop.sfrf %1062
  %p1064 = scmp.eq.s32.totalorder %s1063, 0
  %p1065 = pneg %p1064
  %1067 = shalt.err (%p1065)
  %s1068 = scalar_lea.sflag [#allocation3], 12
  %1069 = vsyncmov %s1068
  %s1070 = vpop.sfrf %1069
  %p1071 = scmp.eq.s32.totalorder %s1070, 0
  %p1072 = pneg %p1071
  %1074 = shalt.err (%p1072)
  %s1075 = scalar_lea.sflag [#allocation3], 13
  %1076 = vsyncmov %s1075
  %s1077 = vpop.sfrf %1076
  %p1078 = scmp.eq.s32.totalorder %s1077, 0
  %p1079 = pneg %p1078
  %1081 = shalt.err (%p1079)
  %s1082 = scalar_lea.sflag [#allocation3], 14
  %1083 = vsyncmov %s1082
  %s1084 = vpop.sfrf %1083
  %p1085 = scmp.eq.s32.totalorder %s1084, 0
  %p1086 = pneg %p1085
  %1088 = shalt.err (%p1086)
  %s1089 = scalar_lea.sflag [#allocation3], 15
  %1090 = vsyncmov %s1089
  %s1091 = vpop.sfrf %1090
  %p1092 = scmp.eq.s32.totalorder %s1091, 0
  %p1093 = pneg %p1092
  %1095 = shalt.err (%p1093)

</llo_original>
